<compile_context>
chip_gen: v7x
topology: tpu7x:2x2x1
jax: 0.10.0
libtpu: 0.0.40
codegen_flags: <defaults>
</compile_context>

<pallas_src>
import functools
import numpy as np
import jax
import jax.numpy as jnp
from jax.experimental import pallas as pl
from jax.experimental.pallas import tpu as pltpu

RNN_OUT = 32
HID = 32


def _recurrent_embedding_kernel(len_ref, seq_ref, w_in_ref, b_in_ref, w_hh_ref,
                                w1_ref, b1_ref, w2_ref, b2_ref, w3_ref, b3_ref,
                                out_ref, *, lanes, max_horizon, rnn_out):
    # len_ref: (tile_n, feat)   pre-floored lengths, each lane repeated rnn_out x
    # seq_ref: (tile_n, max_horizon*lanes)   column t*lanes + l == obs[n, l, 1+t]
    # w_in_ref: (max_horizon*lanes, max_horizon*feat)  block-structured W_ih
    # b_in_ref: (1, max_horizon*feat)                  tiled (b_ih + b_hh)
    # w_hh_ref: (feat, feat)                           block-diagonal W_hh^T
    # w1_ref: (feat, HID)  w2_ref: (HID, HID)  w3_ref: (1, HID)  b3_ref: (1, 1)
    tile_n = seq_ref.shape[0]
    feat = lanes * rnn_out

    len_e = len_ref[...]                      # (tile_n, feat)
    w_hh = w_hh_ref[...]                      # (feat, feat)

    # Every step's input projection (+ RNN bias) in a single MXU matmul:
    #   x_all[:, t*feat + l*rnn_out + r] = seq[n, t, l] * w_ih[r] + (b_ih+b_hh)[r]
    x_all = jnp.dot(seq_ref[...], w_in_ref[...],
                    preferred_element_type=jnp.float32) + b_in_ref[...]

    # Reversed walk over the padded horizon (== torch.flipud of the valid
    # prefix).  Steps with t >= length keep the previous h, so zero-length
    # lanes keep a zero embedding.  Static unroll (max_horizon is small).
    h = jnp.zeros((tile_n, feat), jnp.float32)
    for t in range(max_horizon - 1, -1, -1):
        pre = x_all[:, t * feat:(t + 1) * feat] + jnp.dot(
            h, w_hh, preferred_element_type=jnp.float32)
        h = jnp.where(len_e > float(t), jnp.tanh(pre), h)

    # MLP head: lane-packed h makes layer 1 a single (tile_n, feat)@(feat, 32).
    z1 = jnp.maximum(jnp.dot(h, w1_ref[...],
                             preferred_element_type=jnp.float32) + b1_ref[...], 0.0)
    z2 = jnp.maximum(jnp.dot(z1, w2_ref[...],
                             preferred_element_type=jnp.float32) + b2_ref[...], 0.0)
    # Linear(32 -> 1) as a VPU multiply + lane reduction (no 1-lane MXU matmul).
    out_ref[...] = jnp.sum(z2 * w3_ref[...], axis=-1, keepdims=True) + b3_ref[...]


def recurrent_embedding_forward(obs, params, *, rnn_out=RNN_OUT, max_tile_n=128):
    """obs: (N, lanes, 1 + max_horizon) f32. Returns (N, 1) f32 logits."""
    n, lanes, width = obs.shape
    max_horizon = width - 1
    feat = lanes * rnn_out
    w_ih, w_hh, b_ih, b_hh, w1, b1, w2, b2, w3, b3 = params

    # ---- batch tiling: bounded VMEM, auto double-buffering, megacore sharding
    tile_n = max_tile_n if n >= max_tile_n else ((n + 7) // 8) * 8
    n_pad = ((n + tile_n - 1) // tile_n) * tile_n
    grid = (n_pad // tile_n,)

    obs = obs.astype(jnp.float32)

    # Pre-floored lengths expanded to the packed feature layout (hoists the
    # per-step floor / compare setup out of the recurrence loop).
    len_e = jnp.repeat(jnp.floor(obs[:, :, 0]), rnn_out, axis=1)       # (N, feat)

    # Sequences packed lane-minor: column t*lanes + l == obs[n, l, 1 + t].
    seq = jnp.transpose(obs[:, :, 1:], (0, 2, 1)).reshape(n, max_horizon * lanes)

    if n_pad != n:
        pad = ((0, n_pad - n), (0, 0))
        len_e = jnp.pad(len_e, pad)       # padded rows: length 0 -> embedding 0
        seq = jnp.pad(seq, pad)

    # ---- weight packing (feature dim = lanes*rnn_out, index l*rnn_out + r)
    # One matmul produces every step's input projection.
    w_in = jnp.kron(jnp.eye(max_horizon * lanes, dtype=jnp.float32), w_ih.T)
    b_in = jnp.tile((b_ih + b_hh).reshape(1, rnn_out), (1, max_horizon * lanes))
    # Block-diagonal recurrence: each step is one (tile_n, feat)@(feat, feat).
    w_hh_blk = jnp.kron(jnp.eye(lanes, dtype=jnp.float32), w_hh.T)
    w1t = w1.T                                    # (feat, HID), row = l*rnn_out + r

    args = (len_e, seq, w_in, b_in, w_hh_blk,
            w1t, b1.reshape(1, -1), w2.T, b2.reshape(1, -1),
            w3.reshape(1, -1), b3.reshape(1, 1))

    def const_spec(shape):
        return pl.BlockSpec(shape, lambda i: tuple(0 for _ in shape))

    in_specs = [
        pl.BlockSpec((tile_n, feat), lambda i: (i, 0)),                  # len_e
        pl.BlockSpec((tile_n, max_horizon * lanes), lambda i: (i, 0)),   # seq
    ] + [const_spec(tuple(a.shape)) for a in args[2:]]                   # weights

    kernel = functools.partial(_recurrent_embedding_kernel, lanes=lanes,
                               max_horizon=max_horizon, rnn_out=rnn_out)
    out = pl.pallas_call(
        kernel,
        out_shape=jax.ShapeDtypeStruct((n_pad, 1), jnp.float32),
        grid_spec=pltpu.PrefetchScalarGridSpec(
            num_scalar_prefetch=0,
            grid=grid,
            in_specs=in_specs,
            out_specs=pl.BlockSpec((tile_n, 1), lambda i: (i, 0)),
        ),
        compiler_params=pltpu.CompilerParams(
            dimension_semantics=("parallel",),
            vmem_limit_bytes=32 * 1024 * 1024,
        ),
    )(*args)
    return out[:n]


def init_params(key, lanes, rnn_out=RNN_OUT, hid=HID):
    """Deterministic init matching the PyTorch module's parameter shapes."""
    ks = jax.random.split(key, 10)

    def u(k, shape, fan_in):
        bound = 1.0 / np.sqrt(fan_in)
        return jax.random.uniform(k, shape, jnp.float32, -bound, bound)

    w_ih = u(ks[0], (rnn_out, 1), rnn_out)          # nn.RNN weight_ih_l0
    w_hh = u(ks[1], (rnn_out, rnn_out), rnn_out)    # nn.RNN weight_hh_l0
    b_ih = u(ks[2], (rnn_out,), rnn_out)
    b_hh = u(ks[3], (rnn_out,), rnn_out)
    w1 = u(ks[4], (hid, lanes * rnn_out), lanes * rnn_out)  # Linear(lanes*32, 32)
    b1 = u(ks[5], (hid,), lanes * rnn_out)
    w2 = u(ks[6], (hid, hid), hid)                          # Linear(32, 32)
    b2 = u(ks[7], (hid,), hid)
    w3 = u(ks[8], (1, hid), hid)                            # Linear(32, 1)
    b3 = u(ks[9], (1,), hid)
    return (w_ih, w_hh, b_ih, b_hh, w1, b1, w2, b2, w3, b3)


def reference_forward(obs, params):
    """Pure NumPy re-implementation of the PyTorch forward for validation."""
    w_ih, w_hh, b_ih, b_hh, w1, b1, w2, b2, w3, b3 = params
    n, lanes, width = obs.shape
    rnn_out = w_hh.shape[0]
    emb = np.zeros((n, lanes, rnn_out), dtype=np.float32)
    for i in range(n):
        for l in range(lanes):
            length = int(obs[i, l, 0])
            if length == 0:
                continue
            horizon = obs[i, l, 1:1 + length]
            inp = horizon[::-1]                       # torch.flipud
            h = np.zeros((rnn_out,), np.float32)
            for x in inp:
                h = np.tanh(w_ih[:, 0] * x + b_ih + w_hh @ h + b_hh)
            emb[i, l] = h
    flat = emb.reshape(n, lanes * rnn_out)
    z1 = np.maximum(flat @ w1.T + b1, 0.0)
    z2 = np.maximum(z1 @ w2.T + b2, 0.0)
    return z2 @ w3.T + b3


if __name__ == "__main__":
    lanes, max_horizon, n = 4, 8, 2

    key = jax.random.PRNGKey(0)
    k_len, k_seq, k_par = jax.random.split(key, 3)

    lengths = jax.random.randint(k_len, (n, lanes), 0, max_horizon + 1).astype(jnp.float32)
    horizons = jax.random.normal(k_seq, (n, lanes, max_horizon), jnp.float32)
    obs = jnp.concatenate([lengths[..., None], horizons], axis=-1)   # (N, lanes, 1+max_horizon)

    params = init_params(k_par, lanes)

    out = recurrent_embedding_forward(obs, params)
    out = jax.block_until_ready(out)

    ref = reference_forward(np.asarray(obs), [np.asarray(p) for p in params])
    np.testing.assert_allclose(np.asarray(out), ref, rtol=2e-3, atol=2e-3)
    print("KERNEL_OK")
</pallas_src>

<mosaic_0001>
module attributes {stable_mosaic.version = 11 : i64} {
  func.func @_recurrent_embedding_kernel(%arg0: i32, %arg1: memref<8x128xf32, #tpu.memory_space<vmem>>, %arg2: memref<8x32xf32, #tpu.memory_space<vmem>>, %arg3: memref<32x1024xf32, #tpu.memory_space<vmem>>, %arg4: memref<1x1024xf32, #tpu.memory_space<vmem>>, %arg5: memref<128x128xf32, #tpu.memory_space<vmem>>, %arg6: memref<128x32xf32, #tpu.memory_space<vmem>>, %arg7: memref<1x32xf32, #tpu.memory_space<vmem>>, %arg8: memref<32x32xf32, #tpu.memory_space<vmem>>, %arg9: memref<1x32xf32, #tpu.memory_space<vmem>>, %arg10: memref<1x32xf32, #tpu.memory_space<vmem>>, %arg11: memref<1x1xf32, #tpu.memory_space<vmem>>, %arg12: memref<8x1xf32, #tpu.memory_space<vmem>>) attributes {dimension_semantics = [#tpu.dimension_semantics<parallel>], iteration_bounds = array<i64: 1>, scalar_prefetch = 0 : i64, scratch_operands = 0 : i64, tpu.core_type = #tpu.core_type<tc>, window_params = [{transform_indices = @transform_0, window_bounds = array<i64: 8, 128>}, {transform_indices = @transform_1, window_bounds = array<i64: 8, 32>}, {pipeline_mode = #tpu.pipeline_mode<synchronous>, transform_indices = @transform_2, window_bounds = array<i64: 32, 1024>}, {pipeline_mode = #tpu.pipeline_mode<synchronous>, transform_indices = @transform_3, window_bounds = array<i64: 1, 1024>}, {pipeline_mode = #tpu.pipeline_mode<synchronous>, transform_indices = @transform_4, window_bounds = array<i64: 128, 128>}, {pipeline_mode = #tpu.pipeline_mode<synchronous>, transform_indices = @transform_5, window_bounds = array<i64: 128, 32>}, {pipeline_mode = #tpu.pipeline_mode<synchronous>, transform_indices = @transform_6, window_bounds = array<i64: 1, 32>}, {pipeline_mode = #tpu.pipeline_mode<synchronous>, transform_indices = @transform_7, window_bounds = array<i64: 32, 32>}, {pipeline_mode = #tpu.pipeline_mode<synchronous>, transform_indices = @transform_8, window_bounds = array<i64: 1, 32>}, {pipeline_mode = #tpu.pipeline_mode<synchronous>, transform_indices = @transform_9, window_bounds = array<i64: 1, 32>}, {pipeline_mode = #tpu.pipeline_mode<synchronous>, transform_indices = @transform_10, window_bounds = array<i64: 1, 1>}, {transform_indices = @transform_11, window_bounds = array<i64: 8, 1>}]} {
    %c0 = arith.constant 0 : index
    %c0_0 = arith.constant 0 : index
    %0 = vector.load %arg1[%c0, %c0_0] : memref<8x128xf32, #tpu.memory_space<vmem>>, vector<8x128xf32>
    %c0_1 = arith.constant 0 : index
    %c0_2 = arith.constant 0 : index
    %1 = vector.load %arg5[%c0_1, %c0_2] : memref<128x128xf32, #tpu.memory_space<vmem>>, vector<128x128xf32>
    %c0_3 = arith.constant 0 : index
    %c0_4 = arith.constant 0 : index
    %2 = vector.load %arg2[%c0_3, %c0_4] : memref<8x32xf32, #tpu.memory_space<vmem>>, vector<8x32xf32>
    %c0_5 = arith.constant 0 : index
    %c0_6 = arith.constant 0 : index
    %3 = vector.load %arg3[%c0_5, %c0_6] : memref<32x1024xf32, #tpu.memory_space<vmem>>, vector<32x1024xf32>
    %cst = arith.constant dense<0.000000e+00> : vector<8x1024xf32>
    %4 = tpu.matmul %2, %3, %cst {dimension_numbers = #tpu.dot_dimension_numbers<[1], [0], [0], [1], [0, 0, 1, 1], [], []>} : vector<8x32xf32>, vector<32x1024xf32>, vector<8x1024xf32> -> vector<8x1024xf32>
    %c0_7 = arith.constant 0 : index
    %c0_8 = arith.constant 0 : index
    %5 = vector.load %arg4[%c0_7, %c0_8] : memref<1x1024xf32, #tpu.memory_space<vmem>>, vector<1x1024xf32>
    %6 = vector.broadcast %5 : vector<1x1024xf32> to vector<8x1024xf32>
    %7 = arith.addf %4, %6 : vector<8x1024xf32>
    %cst_9 = arith.constant 0.000000e+00 : f32
    %8 = vector.broadcast %cst_9 : f32 to vector<8x128xf32>
    %9 = vector.extract_strided_slice %7 {offsets = [0, 896], sizes = [8, 128], strides = [1, 1]} : vector<8x1024xf32> to vector<8x128xf32>
    %cst_10 = arith.constant dense<0.000000e+00> : vector<8x128xf32>
    %10 = tpu.matmul %8, %1, %cst_10 {dimension_numbers = #tpu.dot_dimension_numbers<[1], [0], [0], [1], [0, 0, 1, 1], [], []>} : vector<8x128xf32>, vector<128x128xf32>, vector<8x128xf32> -> vector<8x128xf32>
    %11 = arith.addf %9, %10 : vector<8x128xf32>
    %cst_11 = arith.constant 7.000000e+00 : f32
    %12 = vector.broadcast %cst_11 : f32 to vector<8x128xf32>
    %13 = arith.cmpf ogt, %0, %12 : vector<8x128xf32>
    %14 = math.tanh %11 : vector<8x128xf32>
    %15 = arith.select %13, %14, %8 : vector<8x128xi1>, vector<8x128xf32>
    %16 = vector.extract_strided_slice %7 {offsets = [0, 768], sizes = [8, 128], strides = [1, 1]} : vector<8x1024xf32> to vector<8x128xf32>
    %cst_12 = arith.constant dense<0.000000e+00> : vector<8x128xf32>
    %17 = tpu.matmul %15, %1, %cst_12 {dimension_numbers = #tpu.dot_dimension_numbers<[1], [0], [0], [1], [0, 0, 1, 1], [], []>} : vector<8x128xf32>, vector<128x128xf32>, vector<8x128xf32> -> vector<8x128xf32>
    %18 = arith.addf %16, %17 : vector<8x128xf32>
    %cst_13 = arith.constant 6.000000e+00 : f32
    %19 = vector.broadcast %cst_13 : f32 to vector<8x128xf32>
    %20 = arith.cmpf ogt, %0, %19 : vector<8x128xf32>
    %21 = math.tanh %18 : vector<8x128xf32>
    %22 = arith.select %20, %21, %15 : vector<8x128xi1>, vector<8x128xf32>
    %23 = vector.extract_strided_slice %7 {offsets = [0, 640], sizes = [8, 128], strides = [1, 1]} : vector<8x1024xf32> to vector<8x128xf32>
    %cst_14 = arith.constant dense<0.000000e+00> : vector<8x128xf32>
    %24 = tpu.matmul %22, %1, %cst_14 {dimension_numbers = #tpu.dot_dimension_numbers<[1], [0], [0], [1], [0, 0, 1, 1], [], []>} : vector<8x128xf32>, vector<128x128xf32>, vector<8x128xf32> -> vector<8x128xf32>
    %25 = arith.addf %23, %24 : vector<8x128xf32>
    %cst_15 = arith.constant 5.000000e+00 : f32
    %26 = vector.broadcast %cst_15 : f32 to vector<8x128xf32>
    %27 = arith.cmpf ogt, %0, %26 : vector<8x128xf32>
    %28 = math.tanh %25 : vector<8x128xf32>
    %29 = arith.select %27, %28, %22 : vector<8x128xi1>, vector<8x128xf32>
    %30 = vector.extract_strided_slice %7 {offsets = [0, 512], sizes = [8, 128], strides = [1, 1]} : vector<8x1024xf32> to vector<8x128xf32>
    %cst_16 = arith.constant dense<0.000000e+00> : vector<8x128xf32>
    %31 = tpu.matmul %29, %1, %cst_16 {dimension_numbers = #tpu.dot_dimension_numbers<[1], [0], [0], [1], [0, 0, 1, 1], [], []>} : vector<8x128xf32>, vector<128x128xf32>, vector<8x128xf32> -> vector<8x128xf32>
    %32 = arith.addf %30, %31 : vector<8x128xf32>
    %cst_17 = arith.constant 4.000000e+00 : f32
    %33 = vector.broadcast %cst_17 : f32 to vector<8x128xf32>
    %34 = arith.cmpf ogt, %0, %33 : vector<8x128xf32>
    %35 = math.tanh %32 : vector<8x128xf32>
    %36 = arith.select %34, %35, %29 : vector<8x128xi1>, vector<8x128xf32>
    %37 = vector.extract_strided_slice %7 {offsets = [0, 384], sizes = [8, 128], strides = [1, 1]} : vector<8x1024xf32> to vector<8x128xf32>
    %cst_18 = arith.constant dense<0.000000e+00> : vector<8x128xf32>
    %38 = tpu.matmul %36, %1, %cst_18 {dimension_numbers = #tpu.dot_dimension_numbers<[1], [0], [0], [1], [0, 0, 1, 1], [], []>} : vector<8x128xf32>, vector<128x128xf32>, vector<8x128xf32> -> vector<8x128xf32>
    %39 = arith.addf %37, %38 : vector<8x128xf32>
    %cst_19 = arith.constant 3.000000e+00 : f32
    %40 = vector.broadcast %cst_19 : f32 to vector<8x128xf32>
    %41 = arith.cmpf ogt, %0, %40 : vector<8x128xf32>
    %42 = math.tanh %39 : vector<8x128xf32>
    %43 = arith.select %41, %42, %36 : vector<8x128xi1>, vector<8x128xf32>
    %44 = vector.extract_strided_slice %7 {offsets = [0, 256], sizes = [8, 128], strides = [1, 1]} : vector<8x1024xf32> to vector<8x128xf32>
    %cst_20 = arith.constant dense<0.000000e+00> : vector<8x128xf32>
    %45 = tpu.matmul %43, %1, %cst_20 {dimension_numbers = #tpu.dot_dimension_numbers<[1], [0], [0], [1], [0, 0, 1, 1], [], []>} : vector<8x128xf32>, vector<128x128xf32>, vector<8x128xf32> -> vector<8x128xf32>
    %46 = arith.addf %44, %45 : vector<8x128xf32>
    %cst_21 = arith.constant 2.000000e+00 : f32
    %47 = vector.broadcast %cst_21 : f32 to vector<8x128xf32>
    %48 = arith.cmpf ogt, %0, %47 : vector<8x128xf32>
    %49 = math.tanh %46 : vector<8x128xf32>
    %50 = arith.select %48, %49, %43 : vector<8x128xi1>, vector<8x128xf32>
    %51 = vector.extract_strided_slice %7 {offsets = [0, 128], sizes = [8, 128], strides = [1, 1]} : vector<8x1024xf32> to vector<8x128xf32>
    %cst_22 = arith.constant dense<0.000000e+00> : vector<8x128xf32>
    %52 = tpu.matmul %50, %1, %cst_22 {dimension_numbers = #tpu.dot_dimension_numbers<[1], [0], [0], [1], [0, 0, 1, 1], [], []>} : vector<8x128xf32>, vector<128x128xf32>, vector<8x128xf32> -> vector<8x128xf32>
    %53 = arith.addf %51, %52 : vector<8x128xf32>
    %cst_23 = arith.constant 1.000000e+00 : f32
    %54 = vector.broadcast %cst_23 : f32 to vector<8x128xf32>
    %55 = arith.cmpf ogt, %0, %54 : vector<8x128xf32>
    %56 = math.tanh %53 : vector<8x128xf32>
    %57 = arith.select %55, %56, %50 : vector<8x128xi1>, vector<8x128xf32>
    %58 = vector.extract_strided_slice %7 {offsets = [0, 0], sizes = [8, 128], strides = [1, 1]} : vector<8x1024xf32> to vector<8x128xf32>
    %cst_24 = arith.constant dense<0.000000e+00> : vector<8x128xf32>
    %59 = tpu.matmul %57, %1, %cst_24 {dimension_numbers = #tpu.dot_dimension_numbers<[1], [0], [0], [1], [0, 0, 1, 1], [], []>} : vector<8x128xf32>, vector<128x128xf32>, vector<8x128xf32> -> vector<8x128xf32>
    %60 = arith.addf %58, %59 : vector<8x128xf32>
    %cst_25 = arith.constant 0.000000e+00 : f32
    %61 = vector.broadcast %cst_25 : f32 to vector<8x128xf32>
    %62 = arith.cmpf ogt, %0, %61 : vector<8x128xf32>
    %63 = math.tanh %60 : vector<8x128xf32>
    %64 = arith.select %62, %63, %57 : vector<8x128xi1>, vector<8x128xf32>
    %c0_26 = arith.constant 0 : index
    %c0_27 = arith.constant 0 : index
    %65 = vector.load %arg6[%c0_26, %c0_27] : memref<128x32xf32, #tpu.memory_space<vmem>>, vector<128x32xf32>
    %cst_28 = arith.constant dense<0.000000e+00> : vector<8x32xf32>
    %66 = tpu.matmul %64, %65, %cst_28 {dimension_numbers = #tpu.dot_dimension_numbers<[1], [0], [0], [1], [0, 0, 1, 1], [], []>} : vector<8x128xf32>, vector<128x32xf32>, vector<8x32xf32> -> vector<8x32xf32>
    %c0_29 = arith.constant 0 : index
    %c0_30 = arith.constant 0 : index
    %67 = vector.load %arg7[%c0_29, %c0_30] : memref<1x32xf32, #tpu.memory_space<vmem>>, vector<1x32xf32>
    %68 = vector.broadcast %67 : vector<1x32xf32> to vector<8x32xf32>
    %69 = arith.addf %66, %68 : vector<8x32xf32>
    %cst_31 = arith.constant 0.000000e+00 : f32
    %70 = vector.broadcast %cst_31 : f32 to vector<8x32xf32>
    %71 = arith.maximumf %69, %70 : vector<8x32xf32>
    %c0_32 = arith.constant 0 : index
    %c0_33 = arith.constant 0 : index
    %72 = vector.load %arg8[%c0_32, %c0_33] : memref<32x32xf32, #tpu.memory_space<vmem>>, vector<32x32xf32>
    %cst_34 = arith.constant dense<0.000000e+00> : vector<8x32xf32>
    %73 = tpu.matmul %71, %72, %cst_34 {dimension_numbers = #tpu.dot_dimension_numbers<[1], [0], [0], [1], [0, 0, 1, 1], [], []>} : vector<8x32xf32>, vector<32x32xf32>, vector<8x32xf32> -> vector<8x32xf32>
    %c0_35 = arith.constant 0 : index
    %c0_36 = arith.constant 0 : index
    %74 = vector.load %arg9[%c0_35, %c0_36] : memref<1x32xf32, #tpu.memory_space<vmem>>, vector<1x32xf32>
    %75 = vector.broadcast %74 : vector<1x32xf32> to vector<8x32xf32>
    %76 = arith.addf %73, %75 : vector<8x32xf32>
    %cst_37 = arith.constant 0.000000e+00 : f32
    %77 = vector.broadcast %cst_37 : f32 to vector<8x32xf32>
    %78 = arith.maximumf %76, %77 : vector<8x32xf32>
    %c0_38 = arith.constant 0 : index
    %c0_39 = arith.constant 0 : index
    %79 = vector.load %arg10[%c0_38, %c0_39] : memref<1x32xf32, #tpu.memory_space<vmem>>, vector<1x32xf32>
    %80 = vector.broadcast %79 : vector<1x32xf32> to vector<8x32xf32>
    %81 = arith.mulf %78, %80 : vector<8x32xf32>
    %cst_40 = arith.constant dense<0.000000e+00> : vector<8xf32>
    %82 = vector.multi_reduction <add>, %81, %cst_40 [1] : vector<8x32xf32> to vector<8xf32>
    %83 = vector.shape_cast %82 : vector<8xf32> to vector<8x1xf32>
    %c0_41 = arith.constant 0 : index
    %c0_42 = arith.constant 0 : index
    %84 = vector.load %arg11[%c0_41, %c0_42] : memref<1x1xf32, #tpu.memory_space<vmem>>, vector<1x1xf32>
    %85 = vector.broadcast %84 : vector<1x1xf32> to vector<8x1xf32>
    %86 = arith.addf %83, %85 : vector<8x1xf32>
    %c0_43 = arith.constant 0 : index
    %c0_44 = arith.constant 0 : index
    %87 = vector.load %arg12[%c0_43, %c0_44] : memref<8x1xf32, #tpu.memory_space<vmem>>, vector<8x1xf32>
    tpu.vector_store %arg12[%c0_43, %c0_44], %86 {strides = array<i32>} : memref<8x1xf32, #tpu.memory_space<vmem>>, vector<8x1xf32>,
    return
  }
  func.func @transform_0(%arg0: i32) -> (i32, i32) {
    %c0_i32 = arith.constant 0 : i32
    %c0_i32_0 = arith.constant 0 : i32
    return %arg0, %c0_i32 : i32, i32
  }
  func.func @transform_1(%arg0: i32) -> (i32, i32) {
    %c0_i32 = arith.constant 0 : i32
    %c0_i32_0 = arith.constant 0 : i32
    return %arg0, %c0_i32 : i32, i32
  }
  func.func @transform_2(%arg0: i32) -> (i32, i32) {
    %c0_i32 = arith.constant 0 : i32
    %c0_i32_0 = arith.constant 0 : i32
    %c0_i32_1 = arith.constant 0 : i32
    return %c0_i32, %c0_i32_0 : i32, i32
  }
  func.func @transform_3(%arg0: i32) -> (i32, i32) {
    %c0_i32 = arith.constant 0 : i32
    %c0_i32_0 = arith.constant 0 : i32
    %c0_i32_1 = arith.constant 0 : i32
    return %c0_i32, %c0_i32_0 : i32, i32
  }
  func.func @transform_4(%arg0: i32) -> (i32, i32) {
    %c0_i32 = arith.constant 0 : i32
    %c0_i32_0 = arith.constant 0 : i32
    %c0_i32_1 = arith.constant 0 : i32
    return %c0_i32, %c0_i32_0 : i32, i32
  }
  func.func @transform_5(%arg0: i32) -> (i32, i32) {
    %c0_i32 = arith.constant 0 : i32
    %c0_i32_0 = arith.constant 0 : i32
    %c0_i32_1 = arith.constant 0 : i32
    return %c0_i32, %c0_i32_0 : i32, i32
  }
  func.func @transform_6(%arg0: i32) -> (i32, i32) {
    %c0_i32 = arith.constant 0 : i32
    %c0_i32_0 = arith.constant 0 : i32
    %c0_i32_1 = arith.constant 0 : i32
    return %c0_i32, %c0_i32_0 : i32, i32
  }
  func.func @transform_7(%arg0: i32) -> (i32, i32) {
    %c0_i32 = arith.constant 0 : i32
    %c0_i32_0 = arith.constant 0 : i32
    %c0_i32_1 = arith.constant 0 : i32
    return %c0_i32, %c0_i32_0 : i32, i32
  }
  func.func @transform_8(%arg0: i32) -> (i32, i32) {
    %c0_i32 = arith.constant 0 : i32
    %c0_i32_0 = arith.constant 0 : i32
    %c0_i32_1 = arith.constant 0 : i32
    return %c0_i32, %c0_i32_0 : i32, i32
  }
  func.func @transform_9(%arg0: i32) -> (i32, i32) {
    %c0_i32 = arith.constant 0 : i32
    %c0_i32_0 = arith.constant 0 : i32
    %c0_i32_1 = arith.constant 0 : i32
    return %c0_i32, %c0_i32_0 : i32, i32
  }
  func.func @transform_10(%arg0: i32) -> (i32, i32) {
    %c0_i32 = arith.constant 0 : i32
    %c0_i32_0 = arith.constant 0 : i32
    %c0_i32_1 = arith.constant 0 : i32
    return %c0_i32, %c0_i32_0 : i32, i32
  }
  func.func @transform_11(%arg0: i32) -> (i32, i32) {
    %c0_i32 = arith.constant 0 : i32
    %c0_i32_0 = arith.constant 0 : i32
    return %arg0, %c0_i32 : i32, i32
  }
}

</mosaic_0001>

<llo_original>
// kernel: tpu_custom_call.1
$region0: #{tpu_custom_call.1}
  #allocation0 [shape = 'u32[]', space=smem, size = 0x4, offset = 0x4, fixed_abs, tag = 'smem constant byte address 0x4 - core index']
  #allocation1 [shape = 'u32[144,128]{1,0:T(1,128)}', space=vmem, size = 0x12000, scoped, tag = 'internal scratch']
  #allocation2 [shape = 'f32[1,1]{1,0:T(1,128)S(1)}', space=vmem, size = 0x200, scoped, tag = 'scoped memory for tpu_custom_call.1']
  %s0 = inlined_call_operand.vmem [shape: f32[8,128], index: 0, kind: input, shape index: {}]
  %s1 = inlined_call_operand.vmem [shape: f32[8,32], index: 1, kind: input, shape index: {}]
  %s2 = inlined_call_operand.hbm [shape: f32[32,1024], index: 2, kind: input, shape index: {}]
  %s3 = inlined_call_operand.hbm [shape: f32[1,1024], index: 3, kind: input, shape index: {}]
  %s4 = inlined_call_operand.vmem [shape: f32[128,128], index: 4, kind: input, shape index: {}]
  %s5 = inlined_call_operand.vmem [shape: f32[128,32], index: 5, kind: input, shape index: {}]
  %s6 = inlined_call_operand.vmem [shape: f32[1,32], index: 6, kind: input, shape index: {}]
  %s7 = inlined_call_operand.vmem [shape: f32[32,32], index: 7, kind: input, shape index: {}]
  %s8 = inlined_call_operand.vmem [shape: f32[1,32], index: 8, kind: input, shape index: {}]
  %s9 = inlined_call_operand.vmem [shape: f32[1,32], index: 9, kind: input, shape index: {}]
  %s10 = inlined_call_operand.<no memory space> [shape: f32[1,1], index: 10, kind: input, shape index: {}]
  %s11 = inlined_call_operand.vmem [shape: f32[8,1], index: 11, kind: output, shape index: {}]
  %s12 = sld [smem:[#allocation0]]
  $region62: #{tpu_custom_call.1} parent=0
    _
  %s14 = ssub.s32 1, %s12
  %s15 = scalar_select 0, %s14, %s12
  %v16 = vstv %s10
  %17 = vst [vmem:[#allocation2] sm:$0x1] %v16
  $region1: #{tpu_custom_call.1} parent=0
    #allocation3 [shape = 'u8[131072]{0}', space=vmem, size = 0x20000, scoped, tag = 'input window, operand 2, single buffered']
    #allocation4 [shape = 's32[1]{0}', space=sflag, size = 0x4, scoped, tag = 'scoped memory for tpu_custom_call.1']
    #allocation5 [shape = 'u8[4096]{0}', space=vmem, size = 0x1000, scoped, tag = 'input window, operand 3, single buffered']
    #allocation6 [shape = 's32[1]{0}', space=sflag, size = 0x4, scoped, tag = 'scoped memory for tpu_custom_call.1']
    %18 = vsyncpa [#allocation4], 0
    %19 = vsyncpa [#allocation6], 0
    // Predicated region
    $region2: #{tpu_custom_call.1} parent=1 // pred_check
      _
    $region3: #{tpu_custom_call.1} parent=1 // pred_check_branch
      %21 = sbr.rel (0) target = $region5
    $region4: #{tpu_custom_call.1} parent=1 // pred_region
      _
    $region5: #{tpu_custom_call.1} parent=1 // pred_fallthru
      _
    // Predicated region
    $region6: #{tpu_custom_call.1} parent=1 // pred_check
      _
    $region7: #{tpu_custom_call.1} parent=1 // pred_check_branch
      %23 = sbr.rel (0) target = $region9
    $region8: #{tpu_custom_call.1} parent=1 // pred_region
      _
    $region9: #{tpu_custom_call.1} parent=1 // pred_fallthru
      _
    // Predicated region
    $region10: #{tpu_custom_call.1} parent=1 // pred_check
      _
    $region11: #{tpu_custom_call.1} parent=1 // pred_check_branch
      %25 = sbr.rel (0) target = $region13
    $region12: #{tpu_custom_call.1} parent=1 // pred_region
      %s27 = ssub.s32 4096, 4096
      %28 = vsyncadd [#allocation4], %s27
      %s29 = sshll.u32 [#allocation3], 4
      %s30 = int_to_ptr.vmem [resolvable:$true] %s29
      %35 = dma.hbm_to_vmem [thread:$0]  %s2, 4096, %s30, [#allocation4], 1024, 1024, 64
    $region13: #{tpu_custom_call.1} parent=1 // pred_fallthru
      _
    // Predicated region
    $region14: #{tpu_custom_call.1} parent=1 // pred_check
      _
    $region15: #{tpu_custom_call.1} parent=1 // pred_check_branch
      %37 = sbr.rel (0) target = $region17
    $region16: #{tpu_custom_call.1} parent=1 // pred_region
      %s39 = ssub.s32 128, 128
      %40 = vsyncadd [#allocation6], %s39
      %s42 = sshll.u32 [#allocation5], 4
      %s43 = int_to_ptr.vmem [resolvable:$true] %s42
      %45 = dma.hbm_to_vmem [thread:$0]  %s3, 128, %s43, [#allocation6]
    $region17: #{tpu_custom_call.1} parent=1 // pred_fallthru
      _
    // Predicated region
    $region18: #{tpu_custom_call.1} parent=1 // pred_check
      _
    $region19: #{tpu_custom_call.1} parent=1 // pred_check_branch
      %47 = sbr.rel (0) target = $region21
    $region20: #{tpu_custom_call.1} parent=1 // pred_region
      _
    $region21: #{tpu_custom_call.1} parent=1 // pred_fallthru
      _
    // Predicated region
    $region22: #{tpu_custom_call.1} parent=1 // pred_check
      _
    $region23: #{tpu_custom_call.1} parent=1 // pred_check_branch
      %49 = sbr.rel (0) target = $region25
    $region24: #{tpu_custom_call.1} parent=1 // pred_region
      _
    $region25: #{tpu_custom_call.1} parent=1 // pred_fallthru
      _
    // Predicated region
    $region26: #{tpu_custom_call.1} parent=1 // pred_check
      _
    $region27: #{tpu_custom_call.1} parent=1 // pred_check_branch
      %51 = sbr.rel (0) target = $region29
    $region28: #{tpu_custom_call.1} parent=1 // pred_region
      _
    $region29: #{tpu_custom_call.1} parent=1 // pred_fallthru
      _
    // Predicated region
    $region30: #{tpu_custom_call.1} parent=1 // pred_check
      _
    $region31: #{tpu_custom_call.1} parent=1 // pred_check_branch
      %53 = sbr.rel (0) target = $region33
    $region32: #{tpu_custom_call.1} parent=1 // pred_region
      _
    $region33: #{tpu_custom_call.1} parent=1 // pred_fallthru
      _
    // Predicated region
    $region34: #{tpu_custom_call.1} parent=1 // pred_check
      _
    $region35: #{tpu_custom_call.1} parent=1 // pred_check_branch
      %55 = sbr.rel (0) target = $region37
    $region36: #{tpu_custom_call.1} parent=1 // pred_region
      _
    $region37: #{tpu_custom_call.1} parent=1 // pred_fallthru
      _
    // Predicated region
    $region38: #{tpu_custom_call.1} parent=1 // pred_check
      _
    $region39: #{tpu_custom_call.1} parent=1 // pred_check_branch
      %57 = sbr.rel (0) target = $region41
    $region40: #{tpu_custom_call.1} parent=1 // pred_region
      _
    $region41: #{tpu_custom_call.1} parent=1 // pred_fallthru
      _
    // Predicated region
    $region42: #{tpu_custom_call.1} parent=1 // pred_check
      _
    $region43: #{tpu_custom_call.1} parent=1 // pred_check_branch
      %59 = sbr.rel (0) target = $region45
    $region44: #{tpu_custom_call.1} parent=1 // pred_region
      _
    $region45: #{tpu_custom_call.1} parent=1 // pred_fallthru
      _
    // Predicated region
    $region46: #{tpu_custom_call.1} parent=1 // pred_check
      _
    $region47: #{tpu_custom_call.1} parent=1 // pred_check_branch
      %61 = sbr.rel (0) target = $region49
    $region48: #{tpu_custom_call.1} parent=1 // pred_region
      %62 = dma.done [#allocation4], 4096
    $region49: #{tpu_custom_call.1} parent=1 // pred_fallthru
      _
    // Predicated region
    $region50: #{tpu_custom_call.1} parent=1 // pred_check
      _
    $region51: #{tpu_custom_call.1} parent=1 // pred_check_branch
      %64 = sbr.rel (0) target = $region53
    $region52: #{tpu_custom_call.1} parent=1 // pred_region
      %65 = dma.done [#allocation6], 128
    $region53: #{tpu_custom_call.1} parent=1 // pred_fallthru
      _
    %v66 = vld [vmem:[%s0] sm:$0xff]
    %v67 = vld [vmem:[%s4] sm:$0xff]
    %v68 = vld [vmem:[%s4 + $0x8] sm:$0xff]
    %v69 = vld [vmem:[%s4 + $0x10] sm:$0xff]
    %v70 = vld [vmem:[%s4 + $0x18] sm:$0xff]
    %v71 = vld [vmem:[%s4 + $0x20] sm:$0xff]
    %v72 = vld [vmem:[%s4 + $0x28] sm:$0xff]
    %v73 = vld [vmem:[%s4 + $0x30] sm:$0xff]
    %v74 = vld [vmem:[%s4 + $0x38] sm:$0xff]
    %v75 = vld [vmem:[%s4 + $0x40] sm:$0xff]
    %v76 = vld [vmem:[%s4 + $0x48] sm:$0xff]
    %v77 = vld [vmem:[%s4 + $0x50] sm:$0xff]
    %v78 = vld [vmem:[%s4 + $0x58] sm:$0xff]
    %v79 = vld [vmem:[%s4 + $0x60] sm:$0xff]
    %v80 = vld [vmem:[%s4 + $0x68] sm:$0xff]
    %v81 = vld [vmem:[%s4 + $0x70] sm:$0xff]
    %v82 = vld [vmem:[%s4 + $0x78] sm:$0xff]
    %v83 = vld [vmem:[%s1] sm:$0xff]
    %v84 = vld [vmem:[#allocation3] sm:$0xff]
    %v85 = vld [vmem:[#allocation3 + $0x8] sm:$0xff]
    %v86 = vld [vmem:[#allocation3 + $0x10] sm:$0xff]
    %v87 = vld [vmem:[#allocation3 + $0x18] sm:$0xff]
    %v88 = vld [vmem:[#allocation3 + $0x20] sm:$0xff]
    %v89 = vld [vmem:[#allocation3 + $0x28] sm:$0xff]
    %v90 = vld [vmem:[#allocation3 + $0x30] sm:$0xff]
    %v91 = vld [vmem:[#allocation3 + $0x38] sm:$0xff]
    %v92 = vld [vmem:[#allocation3 + $0x40] sm:$0xff]
    %v93 = vld [vmem:[#allocation3 + $0x48] sm:$0xff]
    %v94 = vld [vmem:[#allocation3 + $0x50] sm:$0xff]
    %v95 = vld [vmem:[#allocation3 + $0x58] sm:$0xff]
    %v96 = vld [vmem:[#allocation3 + $0x60] sm:$0xff]
    %v97 = vld [vmem:[#allocation3 + $0x68] sm:$0xff]
    %v98 = vld [vmem:[#allocation3 + $0x70] sm:$0xff]
    %v99 = vld [vmem:[#allocation3 + $0x78] sm:$0xff]
    %v100 = vld [vmem:[#allocation3 + $0x80] sm:$0xff]
    %v101 = vld [vmem:[#allocation3 + $0x88] sm:$0xff]
    %v102 = vld [vmem:[#allocation3 + $0x90] sm:$0xff]
    %v103 = vld [vmem:[#allocation3 + $0x98] sm:$0xff]
    %v104 = vld [vmem:[#allocation3 + $0xa0] sm:$0xff]
    %v105 = vld [vmem:[#allocation3 + $0xa8] sm:$0xff]
    %v106 = vld [vmem:[#allocation3 + $0xb0] sm:$0xff]
    %v107 = vld [vmem:[#allocation3 + $0xb8] sm:$0xff]
    %v108 = vld [vmem:[#allocation3 + $0xc0] sm:$0xff]
    %v109 = vld [vmem:[#allocation3 + $0xc8] sm:$0xff]
    %v110 = vld [vmem:[#allocation3 + $0xd0] sm:$0xff]
    %v111 = vld [vmem:[#allocation3 + $0xd8] sm:$0xff]
    %v112 = vld [vmem:[#allocation3 + $0xe0] sm:$0xff]
    %v113 = vld [vmem:[#allocation3 + $0xe8] sm:$0xff]
    %v114 = vld [vmem:[#allocation3 + $0xf0] sm:$0xff]
    %v115 = vld [vmem:[#allocation3 + $0xf8] sm:$0xff]
    %v116 = vld [vmem:[#allocation5] sm:$0xff]
    %v118 = vlaneseq
    %v119 = vshrl.u32 %v118, 7
    %v120 = vsub.s32 0, %v119
    %v121 = vrot.slane %v116, %v120
    %v122 = vlaneseq
    %v123 = vshrl.u32 %v122, 7
    %v124 = vsub.s32 1, %v123
    %v125 = vrot.slane %v116, %v124
    %v126 = vlaneseq
    %v127 = vshrl.u32 %v126, 7
    %v128 = vsub.s32 2, %v127
    %v129 = vrot.slane %v116, %v128
    %v130 = vlaneseq
    %v131 = vshrl.u32 %v130, 7
    %v132 = vsub.s32 3, %v131
    %v133 = vrot.slane %v116, %v132
    %v134 = vlaneseq
    %v135 = vshrl.u32 %v134, 7
    %v136 = vsub.s32 4, %v135
    %v137 = vrot.slane %v116, %v136
    %v138 = vlaneseq
    %v139 = vshrl.u32 %v138, 7
    %v140 = vsub.s32 5, %v139
    %v141 = vrot.slane %v116, %v140
    %v142 = vlaneseq
    %v143 = vshrl.u32 %v142, 7
    %v144 = vsub.s32 6, %v143
    %v145 = vrot.slane %v116, %v144
    %v146 = vlaneseq
    %v147 = vshrl.u32 %v146, 7
    %v148 = vsub.s32 7, %v147
    %v149 = vrot.slane %v116, %v148
    %vm158 = vcmask 261120
    %v160 = vsel %vm158, %v83, 0
    %162 = vmatprep.subr.mxu0 %v85
    %163 = vmatpush1.msra.mxu0 %v84
    %164 = vmatprep.subr.mxu0 %v93
    %165 = vmatpush1.msra.mxu0 %v92
    %166 = vmatprep.subr.mxu0 %v101
    %167 = vmatpush1.msra.mxu0 %v100
    %168 = vmatprep.subr.mxu0 %v109
    %169 = vmatpush1.msra.mxu0 %v108
    %170 = vmatprep.subr.mxu0 0.0
    %171 = vmatpush1.msra.mxu0 0.0
    %172 = vmatprep.subr.mxu0 0.0
    %173 = vmatpush1.msra.mxu0 0.0
    %174 = vmatprep.subr.mxu0 0.0
    %175 = vmatpush1.msra.mxu0 0.0
    %176 = vmatprep.subr.mxu0 0.0
    %177 = vmatpush1.msra.mxu0 0.0
    %178 = vmatprep.subr.mxu0 0.0
    %179 = vmatpush1.msra.mxu0 0.0
    %180 = vmatprep.subr.mxu0 0.0
    %181 = vmatpush1.msra.mxu0 0.0
    %182 = vmatprep.subr.mxu0 0.0
    %183 = vmatpush1.msra.mxu0 0.0
    %184 = vmatprep.subr.mxu0 0.0
    %185 = vmatpush1.msra.mxu0 0.0
    %186 = vmatprep.subr.mxu0 0.0
    %187 = vmatpush1.msra.mxu0 0.0
    %188 = vmatprep.subr.mxu0 0.0
    %189 = vmatpush1.msra.mxu0 0.0
    %190 = vmatprep.subr.mxu0 0.0
    %191 = vmatpush1.msra.mxu0 0.0
    %192 = vmatprep.subr.mxu0 0.0
    %193 = vmatpush1.msra.mxu0 0.0
    %194 = vmatprep.subr.mxu0 0.0
    %195 = vmatpush1.msra.mxu0 0.0
    %196 = vmatprep.subr.mxu0 0.0
    %197 = vmatpush1.msra.mxu0 0.0
    %198 = vmatprep.subr.mxu0 0.0
    %199 = vmatpush1.msra.mxu0 0.0
    %200 = vmatprep.subr.mxu0 0.0
    %201 = vmatpush1.msra.mxu0 0.0
    %202 = vmatprep.subr.mxu0 0.0
    %203 = vmatpush1.msra.mxu0 0.0
    %204 = vmatprep.subr.mxu0 0.0
    %205 = vmatpush1.msra.mxu0 0.0
    %206 = vmatprep.subr.mxu0 0.0
    %207 = vmatpush1.msra.mxu0 0.0
    %208 = vmatprep.subr.mxu0 0.0
    %209 = vmatpush1.msra.mxu0 0.0
    %210 = vmatprep.subr.mxu0 0.0
    %211 = vmatpush1.msra.mxu0 0.0
    %212 = vmatprep.subr.mxu0 0.0
    %213 = vmatpush1.msra.mxu0 0.0
    %214 = vmatprep.subr.mxu0 0.0
    %215 = vmatpush1.msra.mxu0 0.0
    %216 = vmatprep.subr.mxu0 0.0
    %217 = vmatpush1.msra.mxu0 0.0
    %218 = vmatprep.subr.mxu0 0.0
    %219 = vmatpush1.msra.mxu0 0.0
    %220 = vmatprep.subr.mxu0 0.0
    %221 = vmatpush1.msra.mxu0 0.0
    %222 = vmatprep.subr.mxu0 0.0
    %223 = vmatpush1.msra.mxu0 0.0
    %224 = vmatprep.subr.mxu0 0.0
    %225 = vmatpush1.msra.mxu0 0.0
    %226 = vmatprep.mubr.f32.mxu0 0.0
    %227 = vmatmul.mubr.f32.gmra.mrb[0].mxu0 %v160
    %v228 = vpop.f32.mrb[0].mxu0
    %v229 = vadd.f32 %v121, %v228
    %v230 = vpop.f32.mrb[0].mxu0
    %v231 = vadd.f32 %v125, %v230
    %232 = vdwg.mxu0
    %233 = vmatprep.subr.mxu0 %v87
    %234 = vmatpush1.msra.mxu0 %v86
    %235 = vmatprep.subr.mxu0 %v95
    %236 = vmatpush1.msra.mxu0 %v94
    %237 = vmatprep.subr.mxu0 %v103
    %238 = vmatpush1.msra.mxu0 %v102
    %239 = vmatprep.subr.mxu0 %v111
    %240 = vmatpush1.msra.mxu0 %v110
    %241 = vmatprep.subr.mxu0 0.0
    %242 = vmatpush1.msra.mxu0 0.0
    %243 = vmatprep.subr.mxu0 0.0
    %244 = vmatpush1.msra.mxu0 0.0
    %245 = vmatprep.subr.mxu0 0.0
    %246 = vmatpush1.msra.mxu0 0.0
    %247 = vmatprep.subr.mxu0 0.0
    %248 = vmatpush1.msra.mxu0 0.0
    %249 = vmatprep.subr.mxu0 0.0
    %250 = vmatpush1.msra.mxu0 0.0
    %251 = vmatprep.subr.mxu0 0.0
    %252 = vmatpush1.msra.mxu0 0.0
    %253 = vmatprep.subr.mxu0 0.0
    %254 = vmatpush1.msra.mxu0 0.0
    %255 = vmatprep.subr.mxu0 0.0
    %256 = vmatpush1.msra.mxu0 0.0
    %257 = vmatprep.subr.mxu0 0.0
    %258 = vmatpush1.msra.mxu0 0.0
    %259 = vmatprep.subr.mxu0 0.0
    %260 = vmatpush1.msra.mxu0 0.0
    %261 = vmatprep.subr.mxu0 0.0
    %262 = vmatpush1.msra.mxu0 0.0
    %263 = vmatprep.subr.mxu0 0.0
    %264 = vmatpush1.msra.mxu0 0.0
    %265 = vmatprep.subr.mxu0 0.0
    %266 = vmatpush1.msra.mxu0 0.0
    %267 = vmatprep.subr.mxu0 0.0
    %268 = vmatpush1.msra.mxu0 0.0
    %269 = vmatprep.subr.mxu0 0.0
    %270 = vmatpush1.msra.mxu0 0.0
    %271 = vmatprep.subr.mxu0 0.0
    %272 = vmatpush1.msra.mxu0 0.0
    %273 = vmatprep.subr.mxu0 0.0
    %274 = vmatpush1.msra.mxu0 0.0
    %275 = vmatprep.subr.mxu0 0.0
    %276 = vmatpush1.msra.mxu0 0.0
    %277 = vmatprep.subr.mxu0 0.0
    %278 = vmatpush1.msra.mxu0 0.0
    %279 = vmatprep.subr.mxu0 0.0
    %280 = vmatpush1.msra.mxu0 0.0
    %281 = vmatprep.subr.mxu0 0.0
    %282 = vmatpush1.msra.mxu0 0.0
    %283 = vmatprep.subr.mxu0 0.0
    %284 = vmatpush1.msra.mxu0 0.0
    %285 = vmatprep.subr.mxu0 0.0
    %286 = vmatpush1.msra.mxu0 0.0
    %287 = vmatprep.subr.mxu0 0.0
    %288 = vmatpush1.msra.mxu0 0.0
    %289 = vmatprep.subr.mxu0 0.0
    %290 = vmatpush1.msra.mxu0 0.0
    %291 = vmatprep.subr.mxu0 0.0
    %292 = vmatpush1.msra.mxu0 0.0
    %293 = vmatprep.subr.mxu0 0.0
    %294 = vmatpush1.msra.mxu0 0.0
    %295 = vmatprep.subr.mxu0 0.0
    %296 = vmatpush1.msra.mxu0 0.0
    %297 = vmatprep.mubr.f32.mxu0 0.0
    %298 = vmatmul.mubr.f32.gmra.mrb[0].mxu0 %v160
    %v299 = vpop.f32.mrb[0].mxu0
    %v300 = vadd.f32 %v129, %v299
    %v301 = vpop.f32.mrb[0].mxu0
    %v302 = vadd.f32 %v133, %v301
    %303 = vdwg.mxu0
    %304 = vmatprep.subr.mxu0 %v89
    %305 = vmatpush1.msra.mxu0 %v88
    %306 = vmatprep.subr.mxu0 %v97
    %307 = vmatpush1.msra.mxu0 %v96
    %308 = vmatprep.subr.mxu0 %v105
    %309 = vmatpush1.msra.mxu0 %v104
    %310 = vmatprep.subr.mxu0 %v113
    %311 = vmatpush1.msra.mxu0 %v112
    %312 = vmatprep.subr.mxu0 0.0
    %313 = vmatpush1.msra.mxu0 0.0
    %314 = vmatprep.subr.mxu0 0.0
    %315 = vmatpush1.msra.mxu0 0.0
    %316 = vmatprep.subr.mxu0 0.0
    %317 = vmatpush1.msra.mxu0 0.0
    %318 = vmatprep.subr.mxu0 0.0
    %319 = vmatpush1.msra.mxu0 0.0
    %320 = vmatprep.subr.mxu0 0.0
    %321 = vmatpush1.msra.mxu0 0.0
    %322 = vmatprep.subr.mxu0 0.0
    %323 = vmatpush1.msra.mxu0 0.0
    %324 = vmatprep.subr.mxu0 0.0
    %325 = vmatpush1.msra.mxu0 0.0
    %326 = vmatprep.subr.mxu0 0.0
    %327 = vmatpush1.msra.mxu0 0.0
    %328 = vmatprep.subr.mxu0 0.0
    %329 = vmatpush1.msra.mxu0 0.0
    %330 = vmatprep.subr.mxu0 0.0
    %331 = vmatpush1.msra.mxu0 0.0
    %332 = vmatprep.subr.mxu0 0.0
    %333 = vmatpush1.msra.mxu0 0.0
    %334 = vmatprep.subr.mxu0 0.0
    %335 = vmatpush1.msra.mxu0 0.0
    %336 = vmatprep.subr.mxu0 0.0
    %337 = vmatpush1.msra.mxu0 0.0
    %338 = vmatprep.subr.mxu0 0.0
    %339 = vmatpush1.msra.mxu0 0.0
    %340 = vmatprep.subr.mxu0 0.0
    %341 = vmatpush1.msra.mxu0 0.0
    %342 = vmatprep.subr.mxu0 0.0
    %343 = vmatpush1.msra.mxu0 0.0
    %344 = vmatprep.subr.mxu0 0.0
    %345 = vmatpush1.msra.mxu0 0.0
    %346 = vmatprep.subr.mxu0 0.0
    %347 = vmatpush1.msra.mxu0 0.0
    %348 = vmatprep.subr.mxu0 0.0
    %349 = vmatpush1.msra.mxu0 0.0
    %350 = vmatprep.subr.mxu0 0.0
    %351 = vmatpush1.msra.mxu0 0.0
    %352 = vmatprep.subr.mxu0 0.0
    %353 = vmatpush1.msra.mxu0 0.0
    %354 = vmatprep.subr.mxu0 0.0
    %355 = vmatpush1.msra.mxu0 0.0
    %356 = vmatprep.subr.mxu0 0.0
    %357 = vmatpush1.msra.mxu0 0.0
    %358 = vmatprep.subr.mxu0 0.0
    %359 = vmatpush1.msra.mxu0 0.0
    %360 = vmatprep.subr.mxu0 0.0
    %361 = vmatpush1.msra.mxu0 0.0
    %362 = vmatprep.subr.mxu0 0.0
    %363 = vmatpush1.msra.mxu0 0.0
    %364 = vmatprep.subr.mxu0 0.0
    %365 = vmatpush1.msra.mxu0 0.0
    %366 = vmatprep.subr.mxu0 0.0
    %367 = vmatpush1.msra.mxu0 0.0
    %368 = vmatprep.mubr.f32.mxu0 0.0
    %369 = vmatmul.mubr.f32.gmra.mrb[0].mxu0 %v160
    %v370 = vpop.f32.mrb[0].mxu0
    %v371 = vadd.f32 %v137, %v370
    %v372 = vpop.f32.mrb[0].mxu0
    %v373 = vadd.f32 %v141, %v372
    %374 = vdwg.mxu0
    %375 = vmatprep.subr.mxu0 %v91
    %376 = vmatpush1.msra.mxu0 %v90
    %377 = vmatprep.subr.mxu0 %v99
    %378 = vmatpush1.msra.mxu0 %v98
    %379 = vmatprep.subr.mxu0 %v107
    %380 = vmatpush1.msra.mxu0 %v106
    %381 = vmatprep.subr.mxu0 %v115
    %382 = vmatpush1.msra.mxu0 %v114
    %383 = vmatprep.subr.mxu0 0.0
    %384 = vmatpush1.msra.mxu0 0.0
    %385 = vmatprep.subr.mxu0 0.0
    %386 = vmatpush1.msra.mxu0 0.0
    %387 = vmatprep.subr.mxu0 0.0
    %388 = vmatpush1.msra.mxu0 0.0
    %389 = vmatprep.subr.mxu0 0.0
    %390 = vmatpush1.msra.mxu0 0.0
    %391 = vmatprep.subr.mxu0 0.0
    %392 = vmatpush1.msra.mxu0 0.0
    %393 = vmatprep.subr.mxu0 0.0
    %394 = vmatpush1.msra.mxu0 0.0
    %395 = vmatprep.subr.mxu0 0.0
    %396 = vmatpush1.msra.mxu0 0.0
    %397 = vmatprep.subr.mxu0 0.0
    %398 = vmatpush1.msra.mxu0 0.0
    %399 = vmatprep.subr.mxu0 0.0
    %400 = vmatpush1.msra.mxu0 0.0
    %401 = vmatprep.subr.mxu0 0.0
    %402 = vmatpush1.msra.mxu0 0.0
    %403 = vmatprep.subr.mxu0 0.0
    %404 = vmatpush1.msra.mxu0 0.0
    %405 = vmatprep.subr.mxu0 0.0
    %406 = vmatpush1.msra.mxu0 0.0
    %407 = vmatprep.subr.mxu0 0.0
    %408 = vmatpush1.msra.mxu0 0.0
    %409 = vmatprep.subr.mxu0 0.0
    %410 = vmatpush1.msra.mxu0 0.0
    %411 = vmatprep.subr.mxu0 0.0
    %412 = vmatpush1.msra.mxu0 0.0
    %413 = vmatprep.subr.mxu0 0.0
    %414 = vmatpush1.msra.mxu0 0.0
    %415 = vmatprep.subr.mxu0 0.0
    %416 = vmatpush1.msra.mxu0 0.0
    %417 = vmatprep.subr.mxu0 0.0
    %418 = vmatpush1.msra.mxu0 0.0
    %419 = vmatprep.subr.mxu0 0.0
    %420 = vmatpush1.msra.mxu0 0.0
    %421 = vmatprep.subr.mxu0 0.0
    %422 = vmatpush1.msra.mxu0 0.0
    %423 = vmatprep.subr.mxu0 0.0
    %424 = vmatpush1.msra.mxu0 0.0
    %425 = vmatprep.subr.mxu0 0.0
    %426 = vmatpush1.msra.mxu0 0.0
    %427 = vmatprep.subr.mxu0 0.0
    %428 = vmatpush1.msra.mxu0 0.0
    %429 = vmatprep.subr.mxu0 0.0
    %430 = vmatpush1.msra.mxu0 0.0
    %431 = vmatprep.subr.mxu0 0.0
    %432 = vmatpush1.msra.mxu0 0.0
    %433 = vmatprep.subr.mxu0 0.0
    %434 = vmatpush1.msra.mxu0 0.0
    %435 = vmatprep.subr.mxu0 0.0
    %436 = vmatpush1.msra.mxu0 0.0
    %437 = vmatprep.subr.mxu0 0.0
    %438 = vmatpush1.msra.mxu0 0.0
    %439 = vmatprep.mubr.f32.mxu0 0.0
    %440 = vmatmul.mubr.f32.gmra.mrb[0].mxu0 %v160
    %v441 = vpop.f32.mrb[0].mxu0
    %v442 = vadd.f32 %v145, %v441
    %v443 = vpop.f32.mrb[0].mxu0
    %v444 = vadd.f32 %v149, %v443
    %445 = vdwg.mxu0
    %446 = vmatprep.subr.mxu0 0.0
    %447 = vmatpush1.msra.mxu0 %v67
    %448 = vmatprep.subr.mxu0 0.0
    %449 = vmatpush1.msra.mxu0 %v68
    %450 = vmatprep.subr.mxu0 0.0
    %451 = vmatpush1.msra.mxu0 %v69
    %452 = vmatprep.subr.mxu0 0.0
    %453 = vmatpush1.msra.mxu0 %v70
    %454 = vmatprep.subr.mxu0 0.0
    %455 = vmatpush1.msra.mxu0 %v71
    %456 = vmatprep.subr.mxu0 0.0
    %457 = vmatpush1.msra.mxu0 %v72
    %458 = vmatprep.subr.mxu0 0.0
    %459 = vmatpush1.msra.mxu0 %v73
    %460 = vmatprep.subr.mxu0 0.0
    %461 = vmatpush1.msra.mxu0 %v74
    %462 = vmatprep.subr.mxu0 0.0
    %463 = vmatpush1.msra.mxu0 %v75
    %464 = vmatprep.subr.mxu0 0.0
    %465 = vmatpush1.msra.mxu0 %v76
    %466 = vmatprep.subr.mxu0 0.0
    %467 = vmatpush1.msra.mxu0 %v77
    %468 = vmatprep.subr.mxu0 0.0
    %469 = vmatpush1.msra.mxu0 %v78
    %470 = vmatprep.subr.mxu0 0.0
    %471 = vmatpush1.msra.mxu0 %v79
    %472 = vmatprep.subr.mxu0 0.0
    %473 = vmatpush1.msra.mxu0 %v80
    %474 = vmatprep.subr.mxu0 0.0
    %475 = vmatpush1.msra.mxu0 %v81
    %476 = vmatprep.subr.mxu0 0.0
    %477 = vmatpush1.msra.mxu0 %v82
    %478 = vmatprep.subr.mxu0 0.0
    %479 = vmatpush1.msra.mxu0 0.0
    %480 = vmatprep.subr.mxu0 0.0
    %481 = vmatpush1.msra.mxu0 0.0
    %482 = vmatprep.subr.mxu0 0.0
    %483 = vmatpush1.msra.mxu0 0.0
    %484 = vmatprep.subr.mxu0 0.0
    %485 = vmatpush1.msra.mxu0 0.0
    %486 = vmatprep.subr.mxu0 0.0
    %487 = vmatpush1.msra.mxu0 0.0
    %488 = vmatprep.subr.mxu0 0.0
    %489 = vmatpush1.msra.mxu0 0.0
    %490 = vmatprep.subr.mxu0 0.0
    %491 = vmatpush1.msra.mxu0 0.0
    %492 = vmatprep.subr.mxu0 0.0
    %493 = vmatpush1.msra.mxu0 0.0
    %494 = vmatprep.subr.mxu0 0.0
    %495 = vmatpush1.msra.mxu0 0.0
    %496 = vmatprep.subr.mxu0 0.0
    %497 = vmatpush1.msra.mxu0 0.0
    %498 = vmatprep.subr.mxu0 0.0
    %499 = vmatpush1.msra.mxu0 0.0
    %500 = vmatprep.subr.mxu0 0.0
    %501 = vmatpush1.msra.mxu0 0.0
    %502 = vmatprep.subr.mxu0 0.0
    %503 = vmatpush1.msra.mxu0 0.0
    %504 = vmatprep.subr.mxu0 0.0
    %505 = vmatpush1.msra.mxu0 0.0
    %506 = vmatprep.subr.mxu0 0.0
    %507 = vmatpush1.msra.mxu0 0.0
    %508 = vmatprep.subr.mxu0 0.0
    %509 = vmatpush1.msra.mxu0 0.0
    %510 = vmatprep.mubr.f32.mxu0 0.0
    %511 = vmatmul.mubr.f32.gmra.mrb[0].mxu0 0.0
    %v512 = vpop.f32.mrb[0].mxu0
    %v513 = vadd.f32 0.0, %v512
    %v514 = vpop.f32.mrb[0].mxu0
    %515 = vdwg.mxu0
    %v516 = vadd.f32 %v444, %v513
    %vm517 = vcmp.gt.f32.partialorder %v66, 7.0
    %v518 = vtanh.pop %v516
    %v519 = vsel %vm517, %v518, 0.0
    %520 = vmatprep.subr.mxu0 0.0
    %521 = vmatpush1.msra.mxu0 %v67
    %522 = vmatprep.subr.mxu0 0.0
    %523 = vmatpush1.msra.mxu0 %v68
    %524 = vmatprep.subr.mxu0 0.0
    %525 = vmatpush1.msra.mxu0 %v69
    %526 = vmatprep.subr.mxu0 0.0
    %527 = vmatpush1.msra.mxu0 %v70
    %528 = vmatprep.subr.mxu0 0.0
    %529 = vmatpush1.msra.mxu0 %v71
    %530 = vmatprep.subr.mxu0 0.0
    %531 = vmatpush1.msra.mxu0 %v72
    %532 = vmatprep.subr.mxu0 0.0
    %533 = vmatpush1.msra.mxu0 %v73
    %534 = vmatprep.subr.mxu0 0.0
    %535 = vmatpush1.msra.mxu0 %v74
    %536 = vmatprep.subr.mxu0 0.0
    %537 = vmatpush1.msra.mxu0 %v75
    %538 = vmatprep.subr.mxu0 0.0
    %539 = vmatpush1.msra.mxu0 %v76
    %540 = vmatprep.subr.mxu0 0.0
    %541 = vmatpush1.msra.mxu0 %v77
    %542 = vmatprep.subr.mxu0 0.0
    %543 = vmatpush1.msra.mxu0 %v78
    %544 = vmatprep.subr.mxu0 0.0
    %545 = vmatpush1.msra.mxu0 %v79
    %546 = vmatprep.subr.mxu0 0.0
    %547 = vmatpush1.msra.mxu0 %v80
    %548 = vmatprep.subr.mxu0 0.0
    %549 = vmatpush1.msra.mxu0 %v81
    %550 = vmatprep.subr.mxu0 0.0
    %551 = vmatpush1.msra.mxu0 %v82
    %552 = vmatprep.subr.mxu0 0.0
    %553 = vmatpush1.msra.mxu0 0.0
    %554 = vmatprep.subr.mxu0 0.0
    %555 = vmatpush1.msra.mxu0 0.0
    %556 = vmatprep.subr.mxu0 0.0
    %557 = vmatpush1.msra.mxu0 0.0
    %558 = vmatprep.subr.mxu0 0.0
    %559 = vmatpush1.msra.mxu0 0.0
    %560 = vmatprep.subr.mxu0 0.0
    %561 = vmatpush1.msra.mxu0 0.0
    %562 = vmatprep.subr.mxu0 0.0
    %563 = vmatpush1.msra.mxu0 0.0
    %564 = vmatprep.subr.mxu0 0.0
    %565 = vmatpush1.msra.mxu0 0.0
    %566 = vmatprep.subr.mxu0 0.0
    %567 = vmatpush1.msra.mxu0 0.0
    %568 = vmatprep.subr.mxu0 0.0
    %569 = vmatpush1.msra.mxu0 0.0
    %570 = vmatprep.subr.mxu0 0.0
    %571 = vmatpush1.msra.mxu0 0.0
    %572 = vmatprep.subr.mxu0 0.0
    %573 = vmatpush1.msra.mxu0 0.0
    %574 = vmatprep.subr.mxu0 0.0
    %575 = vmatpush1.msra.mxu0 0.0
    %576 = vmatprep.subr.mxu0 0.0
    %577 = vmatpush1.msra.mxu0 0.0
    %578 = vmatprep.subr.mxu0 0.0
    %579 = vmatpush1.msra.mxu0 0.0
    %580 = vmatprep.subr.mxu0 0.0
    %581 = vmatpush1.msra.mxu0 0.0
    %582 = vmatprep.subr.mxu0 0.0
    %583 = vmatpush1.msra.mxu0 0.0
    %584 = vmatprep.mubr.f32.mxu0 0.0
    %585 = vmatmul.mubr.f32.gmra.mrb[0].mxu0 %v519
    %v586 = vpop.f32.mrb[0].mxu0
    %v587 = vadd.f32 0.0, %v586
    %v588 = vpop.f32.mrb[0].mxu0
    %589 = vdwg.mxu0
    %v590 = vadd.f32 %v442, %v587
    %vm591 = vcmp.gt.f32.partialorder %v66, 6.0
    %v592 = vtanh.pop %v590
    %v593 = vsel %vm591, %v592, %v519
    %594 = vmatprep.subr.mxu0 0.0
    %595 = vmatpush1.msra.mxu0 %v67
    %596 = vmatprep.subr.mxu0 0.0
    %597 = vmatpush1.msra.mxu0 %v68
    %598 = vmatprep.subr.mxu0 0.0
    %599 = vmatpush1.msra.mxu0 %v69
    %600 = vmatprep.subr.mxu0 0.0
    %601 = vmatpush1.msra.mxu0 %v70
    %602 = vmatprep.subr.mxu0 0.0
    %603 = vmatpush1.msra.mxu0 %v71
    %604 = vmatprep.subr.mxu0 0.0
    %605 = vmatpush1.msra.mxu0 %v72
    %606 = vmatprep.subr.mxu0 0.0
    %607 = vmatpush1.msra.mxu0 %v73
    %608 = vmatprep.subr.mxu0 0.0
    %609 = vmatpush1.msra.mxu0 %v74
    %610 = vmatprep.subr.mxu0 0.0
    %611 = vmatpush1.msra.mxu0 %v75
    %612 = vmatprep.subr.mxu0 0.0
    %613 = vmatpush1.msra.mxu0 %v76
    %614 = vmatprep.subr.mxu0 0.0
    %615 = vmatpush1.msra.mxu0 %v77
    %616 = vmatprep.subr.mxu0 0.0
    %617 = vmatpush1.msra.mxu0 %v78
    %618 = vmatprep.subr.mxu0 0.0
    %619 = vmatpush1.msra.mxu0 %v79
    %620 = vmatprep.subr.mxu0 0.0
    %621 = vmatpush1.msra.mxu0 %v80
    %622 = vmatprep.subr.mxu0 0.0
    %623 = vmatpush1.msra.mxu0 %v81
    %624 = vmatprep.subr.mxu0 0.0
    %625 = vmatpush1.msra.mxu0 %v82
    %626 = vmatprep.subr.mxu0 0.0
    %627 = vmatpush1.msra.mxu0 0.0
    %628 = vmatprep.subr.mxu0 0.0
    %629 = vmatpush1.msra.mxu0 0.0
    %630 = vmatprep.subr.mxu0 0.0
    %631 = vmatpush1.msra.mxu0 0.0
    %632 = vmatprep.subr.mxu0 0.0
    %633 = vmatpush1.msra.mxu0 0.0
    %634 = vmatprep.subr.mxu0 0.0
    %635 = vmatpush1.msra.mxu0 0.0
    %636 = vmatprep.subr.mxu0 0.0
    %637 = vmatpush1.msra.mxu0 0.0
    %638 = vmatprep.subr.mxu0 0.0
    %639 = vmatpush1.msra.mxu0 0.0
    %640 = vmatprep.subr.mxu0 0.0
    %641 = vmatpush1.msra.mxu0 0.0
    %642 = vmatprep.subr.mxu0 0.0
    %643 = vmatpush1.msra.mxu0 0.0
    %644 = vmatprep.subr.mxu0 0.0
    %645 = vmatpush1.msra.mxu0 0.0
    %646 = vmatprep.subr.mxu0 0.0
    %647 = vmatpush1.msra.mxu0 0.0
    %648 = vmatprep.subr.mxu0 0.0
    %649 = vmatpush1.msra.mxu0 0.0
    %650 = vmatprep.subr.mxu0 0.0
    %651 = vmatpush1.msra.mxu0 0.0
    %652 = vmatprep.subr.mxu0 0.0
    %653 = vmatpush1.msra.mxu0 0.0
    %654 = vmatprep.subr.mxu0 0.0
    %655 = vmatpush1.msra.mxu0 0.0
    %656 = vmatprep.subr.mxu0 0.0
    %657 = vmatpush1.msra.mxu0 0.0
    %658 = vmatprep.mubr.f32.mxu0 0.0
    %659 = vmatmul.mubr.f32.gmra.mrb[0].mxu0 %v593
    %v660 = vpop.f32.mrb[0].mxu0
    %v661 = vadd.f32 0.0, %v660
    %v662 = vpop.f32.mrb[0].mxu0
    %663 = vdwg.mxu0
    %v664 = vadd.f32 %v373, %v661
    %vm665 = vcmp.gt.f32.partialorder %v66, 5.0
    %v666 = vtanh.pop %v664
    %v667 = vsel %vm665, %v666, %v593
    %668 = vmatprep.subr.mxu0 0.0
    %669 = vmatpush1.msra.mxu0 %v67
    %670 = vmatprep.subr.mxu0 0.0
    %671 = vmatpush1.msra.mxu0 %v68
    %672 = vmatprep.subr.mxu0 0.0
    %673 = vmatpush1.msra.mxu0 %v69
    %674 = vmatprep.subr.mxu0 0.0
    %675 = vmatpush1.msra.mxu0 %v70
    %676 = vmatprep.subr.mxu0 0.0
    %677 = vmatpush1.msra.mxu0 %v71
    %678 = vmatprep.subr.mxu0 0.0
    %679 = vmatpush1.msra.mxu0 %v72
    %680 = vmatprep.subr.mxu0 0.0
    %681 = vmatpush1.msra.mxu0 %v73
    %682 = vmatprep.subr.mxu0 0.0
    %683 = vmatpush1.msra.mxu0 %v74
    %684 = vmatprep.subr.mxu0 0.0
    %685 = vmatpush1.msra.mxu0 %v75
    %686 = vmatprep.subr.mxu0 0.0
    %687 = vmatpush1.msra.mxu0 %v76
    %688 = vmatprep.subr.mxu0 0.0
    %689 = vmatpush1.msra.mxu0 %v77
    %690 = vmatprep.subr.mxu0 0.0
    %691 = vmatpush1.msra.mxu0 %v78
    %692 = vmatprep.subr.mxu0 0.0
    %693 = vmatpush1.msra.mxu0 %v79
    %694 = vmatprep.subr.mxu0 0.0
    %695 = vmatpush1.msra.mxu0 %v80
    %696 = vmatprep.subr.mxu0 0.0
    %697 = vmatpush1.msra.mxu0 %v81
    %698 = vmatprep.subr.mxu0 0.0
    %699 = vmatpush1.msra.mxu0 %v82
    %700 = vmatprep.subr.mxu0 0.0
    %701 = vmatpush1.msra.mxu0 0.0
    %702 = vmatprep.subr.mxu0 0.0
    %703 = vmatpush1.msra.mxu0 0.0
    %704 = vmatprep.subr.mxu0 0.0
    %705 = vmatpush1.msra.mxu0 0.0
    %706 = vmatprep.subr.mxu0 0.0
    %707 = vmatpush1.msra.mxu0 0.0
    %708 = vmatprep.subr.mxu0 0.0
    %709 = vmatpush1.msra.mxu0 0.0
    %710 = vmatprep.subr.mxu0 0.0
    %711 = vmatpush1.msra.mxu0 0.0
    %712 = vmatprep.subr.mxu0 0.0
    %713 = vmatpush1.msra.mxu0 0.0
    %714 = vmatprep.subr.mxu0 0.0
    %715 = vmatpush1.msra.mxu0 0.0
    %716 = vmatprep.subr.mxu0 0.0
    %717 = vmatpush1.msra.mxu0 0.0
    %718 = vmatprep.subr.mxu0 0.0
    %719 = vmatpush1.msra.mxu0 0.0
    %720 = vmatprep.subr.mxu0 0.0
    %721 = vmatpush1.msra.mxu0 0.0
    %722 = vmatprep.subr.mxu0 0.0
    %723 = vmatpush1.msra.mxu0 0.0
    %724 = vmatprep.subr.mxu0 0.0
    %725 = vmatpush1.msra.mxu0 0.0
    %726 = vmatprep.subr.mxu0 0.0
    %727 = vmatpush1.msra.mxu0 0.0
    %728 = vmatprep.subr.mxu0 0.0
    %729 = vmatpush1.msra.mxu0 0.0
    %730 = vmatprep.subr.mxu0 0.0
    %731 = vmatpush1.msra.mxu0 0.0
    %732 = vmatprep.mubr.f32.mxu0 0.0
    %733 = vmatmul.mubr.f32.gmra.mrb[0].mxu0 %v667
    %v734 = vpop.f32.mrb[0].mxu0
    %v735 = vadd.f32 0.0, %v734
    %v736 = vpop.f32.mrb[0].mxu0
    %737 = vdwg.mxu0
    %v738 = vadd.f32 %v371, %v735
    %vm739 = vcmp.gt.f32.partialorder %v66, 4.0
    %v740 = vtanh.pop %v738
    %v741 = vsel %vm739, %v740, %v667
    %742 = vmatprep.subr.mxu0 0.0
    %743 = vmatpush1.msra.mxu0 %v67
    %744 = vmatprep.subr.mxu0 0.0
    %745 = vmatpush1.msra.mxu0 %v68
    %746 = vmatprep.subr.mxu0 0.0
    %747 = vmatpush1.msra.mxu0 %v69
    %748 = vmatprep.subr.mxu0 0.0
    %749 = vmatpush1.msra.mxu0 %v70
    %750 = vmatprep.subr.mxu0 0.0
    %751 = vmatpush1.msra.mxu0 %v71
    %752 = vmatprep.subr.mxu0 0.0
    %753 = vmatpush1.msra.mxu0 %v72
    %754 = vmatprep.subr.mxu0 0.0
    %755 = vmatpush1.msra.mxu0 %v73
    %756 = vmatprep.subr.mxu0 0.0
    %757 = vmatpush1.msra.mxu0 %v74
    %758 = vmatprep.subr.mxu0 0.0
    %759 = vmatpush1.msra.mxu0 %v75
    %760 = vmatprep.subr.mxu0 0.0
    %761 = vmatpush1.msra.mxu0 %v76
    %762 = vmatprep.subr.mxu0 0.0
    %763 = vmatpush1.msra.mxu0 %v77
    %764 = vmatprep.subr.mxu0 0.0
    %765 = vmatpush1.msra.mxu0 %v78
    %766 = vmatprep.subr.mxu0 0.0
    %767 = vmatpush1.msra.mxu0 %v79
    %768 = vmatprep.subr.mxu0 0.0
    %769 = vmatpush1.msra.mxu0 %v80
    %770 = vmatprep.subr.mxu0 0.0
    %771 = vmatpush1.msra.mxu0 %v81
    %772 = vmatprep.subr.mxu0 0.0
    %773 = vmatpush1.msra.mxu0 %v82
    %774 = vmatprep.subr.mxu0 0.0
    %775 = vmatpush1.msra.mxu0 0.0
    %776 = vmatprep.subr.mxu0 0.0
    %777 = vmatpush1.msra.mxu0 0.0
    %778 = vmatprep.subr.mxu0 0.0
    %779 = vmatpush1.msra.mxu0 0.0
    %780 = vmatprep.subr.mxu0 0.0
    %781 = vmatpush1.msra.mxu0 0.0
    %782 = vmatprep.subr.mxu0 0.0
    %783 = vmatpush1.msra.mxu0 0.0
    %784 = vmatprep.subr.mxu0 0.0
    %785 = vmatpush1.msra.mxu0 0.0
    %786 = vmatprep.subr.mxu0 0.0
    %787 = vmatpush1.msra.mxu0 0.0
    %788 = vmatprep.subr.mxu0 0.0
    %789 = vmatpush1.msra.mxu0 0.0
    %790 = vmatprep.subr.mxu0 0.0
    %791 = vmatpush1.msra.mxu0 0.0
    %792 = vmatprep.subr.mxu0 0.0
    %793 = vmatpush1.msra.mxu0 0.0
    %794 = vmatprep.subr.mxu0 0.0
    %795 = vmatpush1.msra.mxu0 0.0
    %796 = vmatprep.subr.mxu0 0.0
    %797 = vmatpush1.msra.mxu0 0.0
    %798 = vmatprep.subr.mxu0 0.0
    %799 = vmatpush1.msra.mxu0 0.0
    %800 = vmatprep.subr.mxu0 0.0
    %801 = vmatpush1.msra.mxu0 0.0
    %802 = vmatprep.subr.mxu0 0.0
    %803 = vmatpush1.msra.mxu0 0.0
    %804 = vmatprep.subr.mxu0 0.0
    %805 = vmatpush1.msra.mxu0 0.0
    %806 = vmatprep.mubr.f32.mxu0 0.0
    %807 = vmatmul.mubr.f32.gmra.mrb[0].mxu0 %v741
    %v808 = vpop.f32.mrb[0].mxu0
    %v809 = vadd.f32 0.0, %v808
    %v810 = vpop.f32.mrb[0].mxu0
    %811 = vdwg.mxu0
    %v812 = vadd.f32 %v302, %v809
    %vm813 = vcmp.gt.f32.partialorder %v66, 3.0
    %v814 = vtanh.pop %v812
    %v815 = vsel %vm813, %v814, %v741
    %816 = vmatprep.subr.mxu0 0.0
    %817 = vmatpush1.msra.mxu0 %v67
    %818 = vmatprep.subr.mxu0 0.0
    %819 = vmatpush1.msra.mxu0 %v68
    %820 = vmatprep.subr.mxu0 0.0
    %821 = vmatpush1.msra.mxu0 %v69
    %822 = vmatprep.subr.mxu0 0.0
    %823 = vmatpush1.msra.mxu0 %v70
    %824 = vmatprep.subr.mxu0 0.0
    %825 = vmatpush1.msra.mxu0 %v71
    %826 = vmatprep.subr.mxu0 0.0
    %827 = vmatpush1.msra.mxu0 %v72
    %828 = vmatprep.subr.mxu0 0.0
    %829 = vmatpush1.msra.mxu0 %v73
    %830 = vmatprep.subr.mxu0 0.0
    %831 = vmatpush1.msra.mxu0 %v74
    %832 = vmatprep.subr.mxu0 0.0
    %833 = vmatpush1.msra.mxu0 %v75
    %834 = vmatprep.subr.mxu0 0.0
    %835 = vmatpush1.msra.mxu0 %v76
    %836 = vmatprep.subr.mxu0 0.0
    %837 = vmatpush1.msra.mxu0 %v77
    %838 = vmatprep.subr.mxu0 0.0
    %839 = vmatpush1.msra.mxu0 %v78
    %840 = vmatprep.subr.mxu0 0.0
    %841 = vmatpush1.msra.mxu0 %v79
    %842 = vmatprep.subr.mxu0 0.0
    %843 = vmatpush1.msra.mxu0 %v80
    %844 = vmatprep.subr.mxu0 0.0
    %845 = vmatpush1.msra.mxu0 %v81
    %846 = vmatprep.subr.mxu0 0.0
    %847 = vmatpush1.msra.mxu0 %v82
    %848 = vmatprep.subr.mxu0 0.0
    %849 = vmatpush1.msra.mxu0 0.0
    %850 = vmatprep.subr.mxu0 0.0
    %851 = vmatpush1.msra.mxu0 0.0
    %852 = vmatprep.subr.mxu0 0.0
    %853 = vmatpush1.msra.mxu0 0.0
    %854 = vmatprep.subr.mxu0 0.0
    %855 = vmatpush1.msra.mxu0 0.0
    %856 = vmatprep.subr.mxu0 0.0
    %857 = vmatpush1.msra.mxu0 0.0
    %858 = vmatprep.subr.mxu0 0.0
    %859 = vmatpush1.msra.mxu0 0.0
    %860 = vmatprep.subr.mxu0 0.0
    %861 = vmatpush1.msra.mxu0 0.0
    %862 = vmatprep.subr.mxu0 0.0
    %863 = vmatpush1.msra.mxu0 0.0
    %864 = vmatprep.subr.mxu0 0.0
    %865 = vmatpush1.msra.mxu0 0.0
    %866 = vmatprep.subr.mxu0 0.0
    %867 = vmatpush1.msra.mxu0 0.0
    %868 = vmatprep.subr.mxu0 0.0
    %869 = vmatpush1.msra.mxu0 0.0
    %870 = vmatprep.subr.mxu0 0.0
    %871 = vmatpush1.msra.mxu0 0.0
    %872 = vmatprep.subr.mxu0 0.0
    %873 = vmatpush1.msra.mxu0 0.0
    %874 = vmatprep.subr.mxu0 0.0
    %875 = vmatpush1.msra.mxu0 0.0
    %876 = vmatprep.subr.mxu0 0.0
    %877 = vmatpush1.msra.mxu0 0.0
    %878 = vmatprep.subr.mxu0 0.0
    %879 = vmatpush1.msra.mxu0 0.0
    %880 = vmatprep.mubr.f32.mxu0 0.0
    %881 = vmatmul.mubr.f32.gmra.mrb[0].mxu0 %v815
    %v882 = vpop.f32.mrb[0].mxu0
    %v883 = vadd.f32 0.0, %v882
    %v884 = vpop.f32.mrb[0].mxu0
    %885 = vdwg.mxu0
    %v886 = vadd.f32 %v300, %v883
    %vm887 = vcmp.gt.f32.partialorder %v66, 2.0
    %v888 = vtanh.pop %v886
    %v889 = vsel %vm887, %v888, %v815
    %890 = vmatprep.subr.mxu0 0.0
    %891 = vmatpush1.msra.mxu0 %v67
    %892 = vmatprep.subr.mxu0 0.0
    %893 = vmatpush1.msra.mxu0 %v68
    %894 = vmatprep.subr.mxu0 0.0
    %895 = vmatpush1.msra.mxu0 %v69
    %896 = vmatprep.subr.mxu0 0.0
    %897 = vmatpush1.msra.mxu0 %v70
    %898 = vmatprep.subr.mxu0 0.0
    %899 = vmatpush1.msra.mxu0 %v71
    %900 = vmatprep.subr.mxu0 0.0
    %901 = vmatpush1.msra.mxu0 %v72
    %902 = vmatprep.subr.mxu0 0.0
    %903 = vmatpush1.msra.mxu0 %v73
    %904 = vmatprep.subr.mxu0 0.0
    %905 = vmatpush1.msra.mxu0 %v74
    %906 = vmatprep.subr.mxu0 0.0
    %907 = vmatpush1.msra.mxu0 %v75
    %908 = vmatprep.subr.mxu0 0.0
    %909 = vmatpush1.msra.mxu0 %v76
    %910 = vmatprep.subr.mxu0 0.0
    %911 = vmatpush1.msra.mxu0 %v77
    %912 = vmatprep.subr.mxu0 0.0
    %913 = vmatpush1.msra.mxu0 %v78
    %914 = vmatprep.subr.mxu0 0.0
    %915 = vmatpush1.msra.mxu0 %v79
    %916 = vmatprep.subr.mxu0 0.0
    %917 = vmatpush1.msra.mxu0 %v80
    %918 = vmatprep.subr.mxu0 0.0
    %919 = vmatpush1.msra.mxu0 %v81
    %920 = vmatprep.subr.mxu0 0.0
    %921 = vmatpush1.msra.mxu0 %v82
    %922 = vmatprep.subr.mxu0 0.0
    %923 = vmatpush1.msra.mxu0 0.0
    %924 = vmatprep.subr.mxu0 0.0
    %925 = vmatpush1.msra.mxu0 0.0
    %926 = vmatprep.subr.mxu0 0.0
    %927 = vmatpush1.msra.mxu0 0.0
    %928 = vmatprep.subr.mxu0 0.0
    %929 = vmatpush1.msra.mxu0 0.0
    %930 = vmatprep.subr.mxu0 0.0
    %931 = vmatpush1.msra.mxu0 0.0
    %932 = vmatprep.subr.mxu0 0.0
    %933 = vmatpush1.msra.mxu0 0.0
    %934 = vmatprep.subr.mxu0 0.0
    %935 = vmatpush1.msra.mxu0 0.0
    %936 = vmatprep.subr.mxu0 0.0
    %937 = vmatpush1.msra.mxu0 0.0
    %938 = vmatprep.subr.mxu0 0.0
    %939 = vmatpush1.msra.mxu0 0.0
    %940 = vmatprep.subr.mxu0 0.0
    %941 = vmatpush1.msra.mxu0 0.0
    %942 = vmatprep.subr.mxu0 0.0
    %943 = vmatpush1.msra.mxu0 0.0
    %944 = vmatprep.subr.mxu0 0.0
    %945 = vmatpush1.msra.mxu0 0.0
    %946 = vmatprep.subr.mxu0 0.0
    %947 = vmatpush1.msra.mxu0 0.0
    %948 = vmatprep.subr.mxu0 0.0
    %949 = vmatpush1.msra.mxu0 0.0
    %950 = vmatprep.subr.mxu0 0.0
    %951 = vmatpush1.msra.mxu0 0.0
    %952 = vmatprep.subr.mxu0 0.0
    %953 = vmatpush1.msra.mxu0 0.0
    %954 = vmatprep.mubr.f32.mxu0 0.0
    %955 = vmatmul.mubr.f32.gmra.mrb[0].mxu0 %v889
    %v956 = vpop.f32.mrb[0].mxu0
    %v957 = vadd.f32 0.0, %v956
    %v958 = vpop.f32.mrb[0].mxu0
    %959 = vdwg.mxu0
    %v960 = vadd.f32 %v231, %v957
    %vm961 = vcmp.gt.f32.partialorder %v66, 1.0
    %v962 = vtanh.pop %v960
    %v963 = vsel %vm961, %v962, %v889
    %964 = vmatprep.subr.mxu0 0.0
    %965 = vmatpush1.msra.mxu0 %v67
    %966 = vmatprep.subr.mxu0 0.0
    %967 = vmatpush1.msra.mxu0 %v68
    %968 = vmatprep.subr.mxu0 0.0
    %969 = vmatpush1.msra.mxu0 %v69
    %970 = vmatprep.subr.mxu0 0.0
    %971 = vmatpush1.msra.mxu0 %v70
    %972 = vmatprep.subr.mxu0 0.0
    %973 = vmatpush1.msra.mxu0 %v71
    %974 = vmatprep.subr.mxu0 0.0
    %975 = vmatpush1.msra.mxu0 %v72
    %976 = vmatprep.subr.mxu0 0.0
    %977 = vmatpush1.msra.mxu0 %v73
    %978 = vmatprep.subr.mxu0 0.0
    %979 = vmatpush1.msra.mxu0 %v74
    %980 = vmatprep.subr.mxu0 0.0
    %981 = vmatpush1.msra.mxu0 %v75
    %982 = vmatprep.subr.mxu0 0.0
    %983 = vmatpush1.msra.mxu0 %v76
    %984 = vmatprep.subr.mxu0 0.0
    %985 = vmatpush1.msra.mxu0 %v77
    %986 = vmatprep.subr.mxu0 0.0
    %987 = vmatpush1.msra.mxu0 %v78
    %988 = vmatprep.subr.mxu0 0.0
    %989 = vmatpush1.msra.mxu0 %v79
    %990 = vmatprep.subr.mxu0 0.0
    %991 = vmatpush1.msra.mxu0 %v80
    %992 = vmatprep.subr.mxu0 0.0
    %993 = vmatpush1.msra.mxu0 %v81
    %994 = vmatprep.subr.mxu0 0.0
    %995 = vmatpush1.msra.mxu0 %v82
    %996 = vmatprep.subr.mxu0 0.0
    %997 = vmatpush1.msra.mxu0 0.0
    %998 = vmatprep.subr.mxu0 0.0
    %999 = vmatpush1.msra.mxu0 0.0
    %1000 = vmatprep.subr.mxu0 0.0
    %1001 = vmatpush1.msra.mxu0 0.0
    %1002 = vmatprep.subr.mxu0 0.0
    %1003 = vmatpush1.msra.mxu0 0.0
    %1004 = vmatprep.subr.mxu0 0.0
    %1005 = vmatpush1.msra.mxu0 0.0
    %1006 = vmatprep.subr.mxu0 0.0
    %1007 = vmatpush1.msra.mxu0 0.0
    %1008 = vmatprep.subr.mxu0 0.0
    %1009 = vmatpush1.msra.mxu0 0.0
    %1010 = vmatprep.subr.mxu0 0.0
    %1011 = vmatpush1.msra.mxu0 0.0
    %1012 = vmatprep.subr.mxu0 0.0
    %1013 = vmatpush1.msra.mxu0 0.0
    %1014 = vmatprep.subr.mxu0 0.0
    %1015 = vmatpush1.msra.mxu0 0.0
    %1016 = vmatprep.subr.mxu0 0.0
    %1017 = vmatpush1.msra.mxu0 0.0
    %1018 = vmatprep.subr.mxu0 0.0
    %1019 = vmatpush1.msra.mxu0 0.0
    %1020 = vmatprep.subr.mxu0 0.0
    %1021 = vmatpush1.msra.mxu0 0.0
    %1022 = vmatprep.subr.mxu0 0.0
    %1023 = vmatpush1.msra.mxu0 0.0
    %1024 = vmatprep.subr.mxu0 0.0
    %1025 = vmatpush1.msra.mxu0 0.0
    %1026 = vmatprep.subr.mxu0 0.0
    %1027 = vmatpush1.msra.mxu0 0.0
    %1028 = vmatprep.mubr.f32.mxu0 0.0
    %1029 = vmatmul.mubr.f32.gmra.mrb[0].mxu0 %v963
    %v1030 = vpop.f32.mrb[0].mxu0
    %v1031 = vadd.f32 0.0, %v1030
    %v1032 = vpop.f32.mrb[0].mxu0
    %1033 = vdwg.mxu0
    %v1034 = vadd.f32 %v229, %v1031
    %vm1035 = vcmp.gt.f32.partialorder %v66, 0.0
    %v1036 = vtanh.pop %v1034
    %v1037 = vsel %vm1035, %v1036, %v963
    %v1038 = vld [vmem:[%s5] sm:$0xff]
    %v1039 = vld [vmem:[%s5 + $0x8] sm:$0xff]
    %v1040 = vld [vmem:[%s5 + $0x10] sm:$0xff]
    %v1041 = vld [vmem:[%s5 + $0x18] sm:$0xff]
    %v1042 = vld [vmem:[%s5 + $0x20] sm:$0xff]
    %v1043 = vld [vmem:[%s5 + $0x28] sm:$0xff]
    %v1044 = vld [vmem:[%s5 + $0x30] sm:$0xff]
    %v1045 = vld [vmem:[%s5 + $0x38] sm:$0xff]
    %v1046 = vld [vmem:[%s5 + $0x40] sm:$0xff]
    %v1047 = vld [vmem:[%s5 + $0x48] sm:$0xff]
    %v1048 = vld [vmem:[%s5 + $0x50] sm:$0xff]
    %v1049 = vld [vmem:[%s5 + $0x58] sm:$0xff]
    %v1050 = vld [vmem:[%s5 + $0x60] sm:$0xff]
    %v1051 = vld [vmem:[%s5 + $0x68] sm:$0xff]
    %v1052 = vld [vmem:[%s5 + $0x70] sm:$0xff]
    %v1053 = vld [vmem:[%s5 + $0x78] sm:$0xff]
    %v1054 = vld [vmem:[%s6] sm:$0x1]
    %v1056 = vlaneseq
    %v1057 = vshrl.u32 %v1056, 7
    %v1058 = vsub.s32 0, %v1057
    %v1059 = vrot.slane %v1054, %v1058
    %1061 = vmatprep.subr.mxu0 0.0
    %1062 = vmatpush1.msra.mxu0 %v1038
    %1063 = vmatprep.subr.mxu0 0.0
    %1064 = vmatpush1.msra.mxu0 %v1039
    %1065 = vmatprep.subr.mxu0 0.0
    %1066 = vmatpush1.msra.mxu0 %v1040
    %1067 = vmatprep.subr.mxu0 0.0
    %1068 = vmatpush1.msra.mxu0 %v1041
    %1069 = vmatprep.subr.mxu0 0.0
    %1070 = vmatpush1.msra.mxu0 %v1042
    %1071 = vmatprep.subr.mxu0 0.0
    %1072 = vmatpush1.msra.mxu0 %v1043
    %1073 = vmatprep.subr.mxu0 0.0
    %1074 = vmatpush1.msra.mxu0 %v1044
    %1075 = vmatprep.subr.mxu0 0.0
    %1076 = vmatpush1.msra.mxu0 %v1045
    %1077 = vmatprep.subr.mxu0 0.0
    %1078 = vmatpush1.msra.mxu0 %v1046
    %1079 = vmatprep.subr.mxu0 0.0
    %1080 = vmatpush1.msra.mxu0 %v1047
    %1081 = vmatprep.subr.mxu0 0.0
    %1082 = vmatpush1.msra.mxu0 %v1048
    %1083 = vmatprep.subr.mxu0 0.0
    %1084 = vmatpush1.msra.mxu0 %v1049
    %1085 = vmatprep.subr.mxu0 0.0
    %1086 = vmatpush1.msra.mxu0 %v1050
    %1087 = vmatprep.subr.mxu0 0.0
    %1088 = vmatpush1.msra.mxu0 %v1051
    %1089 = vmatprep.subr.mxu0 0.0
    %1090 = vmatpush1.msra.mxu0 %v1052
    %1091 = vmatprep.subr.mxu0 0.0
    %1092 = vmatpush1.msra.mxu0 %v1053
    %1093 = vmatprep.subr.mxu0 0.0
    %1094 = vmatpush1.msra.mxu0 0.0
    %1095 = vmatprep.subr.mxu0 0.0
    %1096 = vmatpush1.msra.mxu0 0.0
    %1097 = vmatprep.subr.mxu0 0.0
    %1098 = vmatpush1.msra.mxu0 0.0
    %1099 = vmatprep.subr.mxu0 0.0
    %1100 = vmatpush1.msra.mxu0 0.0
    %1101 = vmatprep.subr.mxu0 0.0
    %1102 = vmatpush1.msra.mxu0 0.0
    %1103 = vmatprep.subr.mxu0 0.0
    %1104 = vmatpush1.msra.mxu0 0.0
    %1105 = vmatprep.subr.mxu0 0.0
    %1106 = vmatpush1.msra.mxu0 0.0
    %1107 = vmatprep.subr.mxu0 0.0
    %1108 = vmatpush1.msra.mxu0 0.0
    %1109 = vmatprep.subr.mxu0 0.0
    %1110 = vmatpush1.msra.mxu0 0.0
    %1111 = vmatprep.subr.mxu0 0.0
    %1112 = vmatpush1.msra.mxu0 0.0
    %1113 = vmatprep.subr.mxu0 0.0
    %1114 = vmatpush1.msra.mxu0 0.0
    %1115 = vmatprep.subr.mxu0 0.0
    %1116 = vmatpush1.msra.mxu0 0.0
    %1117 = vmatprep.subr.mxu0 0.0
    %1118 = vmatpush1.msra.mxu0 0.0
    %1119 = vmatprep.subr.mxu0 0.0
    %1120 = vmatpush1.msra.mxu0 0.0
    %1121 = vmatprep.subr.mxu0 0.0
    %1122 = vmatpush1.msra.mxu0 0.0
    %1123 = vmatprep.subr.mxu0 0.0
    %1124 = vmatpush1.msra.mxu0 0.0
    %1125 = vmatprep.mubr.f32.mxu0 0.0
    %1126 = vmatmul.mubr.f32.gmra.mrb[0].mxu0 %v1037
    %v1127 = vpop.f32.mrb[0].mxu0
    %v1128 = vadd.f32 %v1059, %v1127
    %v1129 = vpop.f32.mrb[0].mxu0
    %1130 = vdwg.mxu0
    %v1131 = vmax.f32 %v1128, 0.0
    %v1132 = vld [vmem:[%s7] sm:$0xff]
    %v1133 = vld [vmem:[%s7 + $0x8] sm:$0xff]
    %v1134 = vld [vmem:[%s7 + $0x10] sm:$0xff]
    %v1135 = vld [vmem:[%s7 + $0x18] sm:$0xff]
    %v1136 = vld [vmem:[%s8] sm:$0x1]
    %v1138 = vlaneseq
    %v1139 = vshrl.u32 %v1138, 7
    %v1140 = vsub.s32 0, %v1139
    %v1141 = vrot.slane %v1136, %v1140
    %v1144 = vsel %vm158, %v1131, 0
    %1146 = vmatprep.subr.mxu0 0.0
    %1147 = vmatpush1.msra.mxu0 %v1132
    %1148 = vmatprep.subr.mxu0 0.0
    %1149 = vmatpush1.msra.mxu0 %v1133
    %1150 = vmatprep.subr.mxu0 0.0
    %1151 = vmatpush1.msra.mxu0 %v1134
    %1152 = vmatprep.subr.mxu0 0.0
    %1153 = vmatpush1.msra.mxu0 %v1135
    %1154 = vmatprep.subr.mxu0 0.0
    %1155 = vmatpush1.msra.mxu0 0.0
    %1156 = vmatprep.subr.mxu0 0.0
    %1157 = vmatpush1.msra.mxu0 0.0
    %1158 = vmatprep.subr.mxu0 0.0
    %1159 = vmatpush1.msra.mxu0 0.0
    %1160 = vmatprep.subr.mxu0 0.0
    %1161 = vmatpush1.msra.mxu0 0.0
    %1162 = vmatprep.subr.mxu0 0.0
    %1163 = vmatpush1.msra.mxu0 0.0
    %1164 = vmatprep.subr.mxu0 0.0
    %1165 = vmatpush1.msra.mxu0 0.0
    %1166 = vmatprep.subr.mxu0 0.0
    %1167 = vmatpush1.msra.mxu0 0.0
    %1168 = vmatprep.subr.mxu0 0.0
    %1169 = vmatpush1.msra.mxu0 0.0
    %1170 = vmatprep.subr.mxu0 0.0
    %1171 = vmatpush1.msra.mxu0 0.0
    %1172 = vmatprep.subr.mxu0 0.0
    %1173 = vmatpush1.msra.mxu0 0.0
    %1174 = vmatprep.subr.mxu0 0.0
    %1175 = vmatpush1.msra.mxu0 0.0
    %1176 = vmatprep.subr.mxu0 0.0
    %1177 = vmatpush1.msra.mxu0 0.0
    %1178 = vmatprep.subr.mxu0 0.0
    %1179 = vmatpush1.msra.mxu0 0.0
    %1180 = vmatprep.subr.mxu0 0.0
    %1181 = vmatpush1.msra.mxu0 0.0
    %1182 = vmatprep.subr.mxu0 0.0
    %1183 = vmatpush1.msra.mxu0 0.0
    %1184 = vmatprep.subr.mxu0 0.0
    %1185 = vmatpush1.msra.mxu0 0.0
    %1186 = vmatprep.subr.mxu0 0.0
    %1187 = vmatpush1.msra.mxu0 0.0
    %1188 = vmatprep.subr.mxu0 0.0
    %1189 = vmatpush1.msra.mxu0 0.0
    %1190 = vmatprep.subr.mxu0 0.0
    %1191 = vmatpush1.msra.mxu0 0.0
    %1192 = vmatprep.subr.mxu0 0.0
    %1193 = vmatpush1.msra.mxu0 0.0
    %1194 = vmatprep.subr.mxu0 0.0
    %1195 = vmatpush1.msra.mxu0 0.0
    %1196 = vmatprep.subr.mxu0 0.0
    %1197 = vmatpush1.msra.mxu0 0.0
    %1198 = vmatprep.subr.mxu0 0.0
    %1199 = vmatpush1.msra.mxu0 0.0
    %1200 = vmatprep.subr.mxu0 0.0
    %1201 = vmatpush1.msra.mxu0 0.0
    %1202 = vmatprep.subr.mxu0 0.0
    %1203 = vmatpush1.msra.mxu0 0.0
    %1204 = vmatprep.subr.mxu0 0.0
    %1205 = vmatpush1.msra.mxu0 0.0
    %1206 = vmatprep.subr.mxu0 0.0
    %1207 = vmatpush1.msra.mxu0 0.0
    %1208 = vmatprep.subr.mxu0 0.0
    %1209 = vmatpush1.msra.mxu0 0.0
    %1210 = vmatprep.mubr.f32.mxu0 0.0
    %1211 = vmatmul.mubr.f32.gmra.mrb[0].mxu0 %v1144
    %v1212 = vpop.f32.mrb[0].mxu0
    %v1213 = vadd.f32 %v1141, %v1212
    %v1214 = vpop.f32.mrb[0].mxu0
    %1215 = vdwg.mxu0
    %v1216 = vmax.f32 %v1213, 0.0
    %v1217 = vld [vmem:[%s9] sm:$0x1]
    %v1219 = vlaneseq
    %v1220 = vshrl.u32 %v1219, 7
    %v1221 = vsub.s32 0, %v1220
    %v1222 = vrot.slane %v1217, %v1221
    %v1224 = vmul.f32 %v1216, %v1222
    %v1225 = vsel %vm158, %v1224, 0.0
    %1226 = vadd.xlane.f32.xlu0 %v1225
    %v1227 = vpop.xlane.xlu0 %1226
    %v1228 = vld [vmem:[#allocation2] sm:$0x1]
    %v1230 = vlaneseq
    %v1231 = vshrl.u32 %v1230, 7
    %v1232 = vsub.s32 0, %v1231
    %v1233 = vrot.slane %v1228, %v1232
    %v1235 = vadd.f32 %v1227, %v1233
    %vm1236 = vcmask 7168
    %1237 = vst.msk [vmem:[%s11] sm:$0xff] %vm1236, %v1235
    // Predicated region
    $region54: #{tpu_custom_call.1} parent=1 // pred_check
      _
    $region55: #{tpu_custom_call.1} parent=1 // pred_check_branch
      %1239 = sbr.rel (0) target = $region57
    $region56: #{tpu_custom_call.1} parent=1 // pred_region
      _
    $region57: #{tpu_custom_call.1} parent=1 // pred_fallthru
      _
    // Predicated region
    $region58: #{tpu_custom_call.1} parent=1 // pred_check
      _
    $region59: #{tpu_custom_call.1} parent=1 // pred_check_branch
      %1241 = sbr.rel (0) target = $region61
    $region60: #{tpu_custom_call.1} parent=1 // pred_region
      _
    $region61: #{tpu_custom_call.1} parent=1 // pred_fallthru
      _
    %1242 = vsyncpa [#allocation4], 1
    %1243 = vsyncpa [#allocation6], 1

</llo_original>
